<compile_context>
chip_gen: v7x
topology: tpu7x:2x2x1
jax: 0.10.0
libtpu: 0.0.40
codegen_flags: <defaults>
</compile_context>

<pallas_src>
import jax
import jax.numpy as jnp
from jax.experimental import pallas as pl
from jax.experimental.pallas import tpu as pltpu

# --- module constants (from the PyTorch source) ---
INPUT_DIM_PER_POINT = 2
LATENT_DIM = 20
NUM_POINTS = 100
OUTPUT_DIM_PER_POINT = 1
INPUT_DIM = NUM_POINTS * (INPUT_DIM_PER_POINT + OUTPUT_DIM_PER_POINT)   # 300
X_OUT_DIM = NUM_POINTS * INPUT_DIM_PER_POINT                            # 200
Y_OUT_DIM = NUM_POINTS * OUTPUT_DIM_PER_POINT                           # 100
HEAD_DIM = X_OUT_DIM + Y_OUT_DIM                                        # 300

LANE = 128
IN_PAD = 384    # 300 padded up to 3*128 (zero feature columns / zero weight rows)
OUT_PAD = 384   # fused head output padded to 3*128 for unmasked stores


def _round_up(n, m):
    return ((n + m - 1) // m) * m


# ----------------------------------------------------------------------------- kernel
def _ae_kernel(x_ref,                       # (TB, 384) bf16 activations
               w1, b1, w2, b2, w3, b3,      # encoder 384->512->256->128
               wzd, bzd,                    # fused bottleneck+dec1: 128->128 (task in bzd)
               wd2, bd2,                    # decoder 128->256
               wh, bh,                      # fused heads 256->384 (200 | 100 | 84 zero pad)
               o_ref):                      # (TB, 384) f32
    relu = lambda v: jnp.maximum(v, 0.0)
    f32 = jnp.float32
    bf16 = jnp.bfloat16

    x = x_ref[...]
    h = relu(jnp.dot(x, w1[...], preferred_element_type=f32) + b1[...])                   # (TB, 512)
    h = relu(jnp.dot(h.astype(bf16), w2[...], preferred_element_type=f32) + b2[...])      # (TB, 256)
    h = relu(jnp.dot(h.astype(bf16), w3[...], preferred_element_type=f32) + b3[...])      # (TB, 128)
    # we4 (128x20) and wd1[:20] (20x128) fused on host into one 128x128 weight; the
    # task indicator row and bd1 are folded into bzd.  Exact up to f32/bf16 rounding.
    h = relu(jnp.dot(h.astype(bf16), wzd[...], preferred_element_type=f32) + bzd[...])    # (TB, 128)
    h = relu(jnp.dot(h.astype(bf16), wd2[...], preferred_element_type=f32) + bd2[...])    # (TB, 256)
    # Fused lane-dense output heads: [x_head(200) | y_head(100) | zeros(84)].
    o_ref[...] = jnp.dot(h.astype(bf16), wh[...], preferred_element_type=f32) + bh[...]


# ----------------------------------------------------------------------------- params
def _init_linear(key, fan_in, fan_out):
    """PyTorch-style nn.Linear init; weight returned transposed as (in, out)."""
    k = 1.0 / jnp.sqrt(jnp.float32(fan_in))
    kw, kb = jax.random.split(key)
    w = jax.random.uniform(kw, (fan_in, fan_out), jnp.float32, -k, k)
    b = jax.random.uniform(kb, (1, fan_out), jnp.float32, -k, k)
    return w, b


def init_params(key):
    """Canonical f32 parameters mirroring the PyTorch module (weights as (in, out))."""
    keys = jax.random.split(key, 8)
    p = {}
    # encoder: 300 -> 512 -> 256 -> 128 -> 20
    p["we1"], p["be1"] = _init_linear(keys[0], INPUT_DIM, 512)
    p["we2"], p["be2"] = _init_linear(keys[1], 512, 256)
    p["we3"], p["be3"] = _init_linear(keys[2], 256, 128)
    p["we4"], p["be4"] = _init_linear(keys[3], 128, LATENT_DIM)
    # decoder: (20+1) -> 128 -> 256 -> {200, 100}
    wd1, p["bd1"] = _init_linear(keys[4], LATENT_DIM + 1, 128)
    p["wd1z"] = wd1[:LATENT_DIM, :]          # (20, 128)
    p["wd1t"] = wd1[LATENT_DIM:, :]          # (1, 128)
    p["wd2"], p["bd2"] = _init_linear(keys[5], 128, 256)
    p["wxw"], p["bxw"] = _init_linear(keys[6], 256, X_OUT_DIM)
    p["wyw"], p["byw"] = _init_linear(keys[7], 256, Y_OUT_DIM)
    return p


def prepare_kernel_params(p, weight_dtype=jnp.bfloat16):
    """Fuse / pad / cast the canonical params into kernel-ready operands."""
    f32 = jnp.float32
    kp = {}
    # input layer padded on K (300 -> 384) with zero rows
    kp["w1"] = jnp.pad(p["we1"], ((0, IN_PAD - INPUT_DIM), (0, 0))).astype(weight_dtype)
    kp["b1"] = p["be1"].astype(f32)
    kp["w2"] = p["we2"].astype(weight_dtype)
    kp["b2"] = p["be2"].astype(f32)
    kp["w3"] = p["we3"].astype(weight_dtype)
    kp["b3"] = p["be3"].astype(f32)
    # bottleneck fusion: (h @ we4 + be4) @ wd1z + bd1  ==  h @ (we4 @ wd1z) + (be4 @ wd1z + bd1)
    kp["wzd"] = (p["we4"] @ p["wd1z"]).astype(weight_dtype)                  # (128, 128)
    kp["bzd_base"] = (p["be4"] @ p["wd1z"] + p["bd1"]).astype(f32)           # (1, 128)
    kp["wd1t"] = p["wd1t"].astype(f32)                                       # (1, 128), task row
    kp["wd2"] = p["wd2"].astype(weight_dtype)
    kp["bd2"] = p["bd2"].astype(f32)
    # fused output heads, padded on N (300 -> 384) with zero columns
    wh = jnp.concatenate([p["wxw"], p["wyw"]], axis=1)                       # (256, 300)
    bh = jnp.concatenate([p["bxw"], p["byw"]], axis=1)                       # (1, 300)
    kp["wh"] = jnp.pad(wh, ((0, 0), (0, OUT_PAD - HEAD_DIM))).astype(weight_dtype)
    kp["bh"] = jnp.pad(bh, ((0, 0), (0, OUT_PAD - HEAD_DIM))).astype(f32)
    return kp


# ----------------------------------------------------------------------------- wrapper
def autoencoder_forward(kparams, x, task, *, tile_b=256):
    """x: (B, 300) f32; task: python string (resolved at trace time). Returns (x_out, y_out)."""
    B = x.shape[0]
    task_val = 1.0 if task in ("add_numbers", "subtract_numbers") else 0.0
    # fold the task indicator into the fused decoder-first-layer bias (trace-time constant)
    bzd = kparams["bzd_base"] + jnp.float32(task_val) * kparams["wd1t"]      # (1, 128)

    tb = min(tile_b, _round_up(B, 8))
    tb = _round_up(tb, 8)
    b_pad = _round_up(B, tb)
    grid = (pl.cdiv(b_pad, tb),)

    x_p = jnp.pad(x, ((0, b_pad - B), (0, IN_PAD - INPUT_DIM))).astype(jnp.bfloat16)

    operands = [
        x_p,
        kparams["w1"], kparams["b1"],
        kparams["w2"], kparams["b2"],
        kparams["w3"], kparams["b3"],
        kparams["wzd"], bzd,
        kparams["wd2"], kparams["bd2"],
        kparams["wh"], kparams["bh"],
    ]

    x_spec = pl.BlockSpec((tb, IN_PAD), lambda i: (i, 0))
    # weights/biases: full-array blocks with a constant index_map -> stay VMEM-resident
    const_spec = lambda a: pl.BlockSpec(a.shape, lambda i: (0, 0))
    in_specs = [x_spec] + [const_spec(a) for a in operands[1:]]
    out_spec = pl.BlockSpec((tb, OUT_PAD), lambda i: (i, 0))

    out = pl.pallas_call(
        _ae_kernel,
        out_shape=jax.ShapeDtypeStruct((b_pad, OUT_PAD), jnp.float32),
        grid=grid,
        in_specs=in_specs,
        out_specs=out_spec,
        compiler_params=pltpu.CompilerParams(
            dimension_semantics=("parallel",),          # megacore sharding on v7x
        ),
    )(*operands)

    out = out[:B, :HEAD_DIM]
    x_out = out[:, :X_OUT_DIM].reshape(B, NUM_POINTS, INPUT_DIM_PER_POINT)
    y_out = out[:, X_OUT_DIM:].reshape(B, NUM_POINTS, OUTPUT_DIM_PER_POINT)
    return x_out, y_out


# ----------------------------------------------------------------------------- reference
def _reference_forward(params, x, task):
    """Pure-JAX f32 reference matching the PyTorch module exactly (unfused)."""
    relu = lambda v: jnp.maximum(v, 0.0)
    h = relu(x @ params["we1"] + params["be1"])
    h = relu(h @ params["we2"] + params["be2"])
    h = relu(h @ params["we3"] + params["be3"])
    z = h @ params["we4"] + params["be4"]
    t = 1.0 if task in ("add_numbers", "subtract_numbers") else 0.0
    ti = jnp.full((x.shape[0], 1), t, jnp.float32)
    zc = jnp.concatenate([z, ti], axis=1)
    wd1 = jnp.concatenate([params["wd1z"], params["wd1t"]], axis=0)
    h = relu(zc @ wd1 + params["bd1"])
    h = relu(h @ params["wd2"] + params["bd2"])
    xo = (h @ params["wxw"] + params["bxw"]).reshape(-1, NUM_POINTS, INPUT_DIM_PER_POINT)
    yo = (h @ params["wyw"] + params["byw"]).reshape(-1, NUM_POINTS, OUTPUT_DIM_PER_POINT)
    return xo, yo


if __name__ == "__main__":
    key = jax.random.PRNGKey(0)
    kp_key, kx_key = jax.random.split(key)
    params = init_params(kp_key)
    kparams = prepare_kernel_params(params)

    B = 2
    x = jax.random.normal(kx_key, (B, INPUT_DIM), jnp.float32)

    x_out, y_out = autoencoder_forward(kparams, x, "add_numbers")
    jax.block_until_ready((x_out, y_out))

    # sanity check against the pure-JAX f32 reference (kernel uses bf16 MXU operands,
    # so allow a looser tolerance than pure-f32).
    xr, yr = _reference_forward(params, x, "add_numbers")
    assert x_out.shape == (B, NUM_POINTS, INPUT_DIM_PER_POINT)
    assert y_out.shape == (B, NUM_POINTS, OUTPUT_DIM_PER_POINT)
    assert jnp.allclose(x_out, xr, atol=5e-2, rtol=5e-2), float(jnp.max(jnp.abs(x_out - xr)))
    assert jnp.allclose(y_out, yr, atol=5e-2, rtol=5e-2), float(jnp.max(jnp.abs(y_out - yr)))

    # also exercise the "other task" branch (task indicator = 0)
    x_out0, y_out0 = autoencoder_forward(kparams, x, "something_else")
    jax.block_until_ready((x_out0, y_out0))
    xr0, yr0 = _reference_forward(params, x, "something_else")
    assert jnp.allclose(x_out0, xr0, atol=5e-2, rtol=5e-2)
    assert jnp.allclose(y_out0, yr0, atol=5e-2, rtol=5e-2)

    print("KERNEL_OK")
</pallas_src>

<mosaic_0001>
module attributes {stable_mosaic.version = 11 : i64} {
  func.func @_ae_kernel(%arg0: i32, %arg1: memref<8x384xbf16, #tpu.memory_space<vmem>>, %arg2: memref<384x512xbf16, #tpu.memory_space<vmem>>, %arg3: memref<1x512xf32, #tpu.memory_space<vmem>>, %arg4: memref<512x256xbf16, #tpu.memory_space<vmem>>, %arg5: memref<1x256xf32, #tpu.memory_space<vmem>>, %arg6: memref<256x128xbf16, #tpu.memory_space<vmem>>, %arg7: memref<1x128xf32, #tpu.memory_space<vmem>>, %arg8: memref<128x128xbf16, #tpu.memory_space<vmem>>, %arg9: memref<1x128xf32, #tpu.memory_space<vmem>>, %arg10: memref<128x256xbf16, #tpu.memory_space<vmem>>, %arg11: memref<1x256xf32, #tpu.memory_space<vmem>>, %arg12: memref<256x384xbf16, #tpu.memory_space<vmem>>, %arg13: memref<1x384xf32, #tpu.memory_space<vmem>>, %arg14: memref<8x384xf32, #tpu.memory_space<vmem>>) attributes {dimension_semantics = [#tpu.dimension_semantics<parallel>], iteration_bounds = array<i64: 1>, scalar_prefetch = 0 : i64, scratch_operands = 0 : i64, tpu.core_type = #tpu.core_type<tc>, window_params = [{transform_indices = @transform_0, window_bounds = array<i64: 8, 384>}, {pipeline_mode = #tpu.pipeline_mode<synchronous>, transform_indices = @transform_1, window_bounds = array<i64: 384, 512>}, {pipeline_mode = #tpu.pipeline_mode<synchronous>, transform_indices = @transform_2, window_bounds = array<i64: 1, 512>}, {pipeline_mode = #tpu.pipeline_mode<synchronous>, transform_indices = @transform_3, window_bounds = array<i64: 512, 256>}, {pipeline_mode = #tpu.pipeline_mode<synchronous>, transform_indices = @transform_4, window_bounds = array<i64: 1, 256>}, {pipeline_mode = #tpu.pipeline_mode<synchronous>, transform_indices = @transform_5, window_bounds = array<i64: 256, 128>}, {pipeline_mode = #tpu.pipeline_mode<synchronous>, transform_indices = @transform_6, window_bounds = array<i64: 1, 128>}, {pipeline_mode = #tpu.pipeline_mode<synchronous>, transform_indices = @transform_7, window_bounds = array<i64: 128, 128>}, {pipeline_mode = #tpu.pipeline_mode<synchronous>, transform_indices = @transform_8, window_bounds = array<i64: 1, 128>}, {pipeline_mode = #tpu.pipeline_mode<synchronous>, transform_indices = @transform_9, window_bounds = array<i64: 128, 256>}, {pipeline_mode = #tpu.pipeline_mode<synchronous>, transform_indices = @transform_10, window_bounds = array<i64: 1, 256>}, {pipeline_mode = #tpu.pipeline_mode<synchronous>, transform_indices = @transform_11, window_bounds = array<i64: 256, 384>}, {pipeline_mode = #tpu.pipeline_mode<synchronous>, transform_indices = @transform_12, window_bounds = array<i64: 1, 384>}, {transform_indices = @transform_13, window_bounds = array<i64: 8, 384>}]} {
    %c0 = arith.constant 0 : index
    %c0_0 = arith.constant 0 : index
    %0 = vector.load %arg1[%c0, %c0_0] : memref<8x384xbf16, #tpu.memory_space<vmem>>, vector<8x384xbf16>
    %c0_1 = arith.constant 0 : index
    %c0_2 = arith.constant 0 : index
    %1 = vector.load %arg2[%c0_1, %c0_2] : memref<384x512xbf16, #tpu.memory_space<vmem>>, vector<384x512xbf16>
    %cst = arith.constant dense<0.000000e+00> : vector<8x512xf32>
    %2 = tpu.matmul %0, %1, %cst {dimension_numbers = #tpu.dot_dimension_numbers<[1], [0], [0], [1], [0, 0, 1, 1], [], []>} : vector<8x384xbf16>, vector<384x512xbf16>, vector<8x512xf32> -> vector<8x512xf32>
    %c0_3 = arith.constant 0 : index
    %c0_4 = arith.constant 0 : index
    %3 = vector.load %arg3[%c0_3, %c0_4] : memref<1x512xf32, #tpu.memory_space<vmem>>, vector<1x512xf32>
    %4 = vector.broadcast %3 : vector<1x512xf32> to vector<8x512xf32>
    %5 = arith.addf %2, %4 : vector<8x512xf32>
    %cst_5 = arith.constant 0.000000e+00 : f32
    %6 = vector.broadcast %cst_5 : f32 to vector<8x512xf32>
    %7 = arith.maximumf %5, %6 : vector<8x512xf32>
    %8 = arith.truncf %7 : vector<8x512xf32> to vector<8x512xbf16>
    %c0_6 = arith.constant 0 : index
    %c0_7 = arith.constant 0 : index
    %9 = vector.load %arg4[%c0_6, %c0_7] : memref<512x256xbf16, #tpu.memory_space<vmem>>, vector<512x256xbf16>
    %cst_8 = arith.constant dense<0.000000e+00> : vector<8x256xf32>
    %10 = tpu.matmul %8, %9, %cst_8 {dimension_numbers = #tpu.dot_dimension_numbers<[1], [0], [0], [1], [0, 0, 1, 1], [], []>} : vector<8x512xbf16>, vector<512x256xbf16>, vector<8x256xf32> -> vector<8x256xf32>
    %c0_9 = arith.constant 0 : index
    %c0_10 = arith.constant 0 : index
    %11 = vector.load %arg5[%c0_9, %c0_10] : memref<1x256xf32, #tpu.memory_space<vmem>>, vector<1x256xf32>
    %12 = vector.broadcast %11 : vector<1x256xf32> to vector<8x256xf32>
    %13 = arith.addf %10, %12 : vector<8x256xf32>
    %cst_11 = arith.constant 0.000000e+00 : f32
    %14 = vector.broadcast %cst_11 : f32 to vector<8x256xf32>
    %15 = arith.maximumf %13, %14 : vector<8x256xf32>
    %16 = arith.truncf %15 : vector<8x256xf32> to vector<8x256xbf16>
    %c0_12 = arith.constant 0 : index
    %c0_13 = arith.constant 0 : index
    %17 = vector.load %arg6[%c0_12, %c0_13] : memref<256x128xbf16, #tpu.memory_space<vmem>>, vector<256x128xbf16>
    %cst_14 = arith.constant dense<0.000000e+00> : vector<8x128xf32>
    %18 = tpu.matmul %16, %17, %cst_14 {dimension_numbers = #tpu.dot_dimension_numbers<[1], [0], [0], [1], [0, 0, 1, 1], [], []>} : vector<8x256xbf16>, vector<256x128xbf16>, vector<8x128xf32> -> vector<8x128xf32>
    %c0_15 = arith.constant 0 : index
    %c0_16 = arith.constant 0 : index
    %19 = vector.load %arg7[%c0_15, %c0_16] : memref<1x128xf32, #tpu.memory_space<vmem>>, vector<1x128xf32>
    %20 = vector.broadcast %19 : vector<1x128xf32> to vector<8x128xf32>
    %21 = arith.addf %18, %20 : vector<8x128xf32>
    %cst_17 = arith.constant 0.000000e+00 : f32
    %22 = vector.broadcast %cst_17 : f32 to vector<8x128xf32>
    %23 = arith.maximumf %21, %22 : vector<8x128xf32>
    %24 = arith.truncf %23 : vector<8x128xf32> to vector<8x128xbf16>
    %c0_18 = arith.constant 0 : index
    %c0_19 = arith.constant 0 : index
    %25 = vector.load %arg8[%c0_18, %c0_19] : memref<128x128xbf16, #tpu.memory_space<vmem>>, vector<128x128xbf16>
    %cst_20 = arith.constant dense<0.000000e+00> : vector<8x128xf32>
    %26 = tpu.matmul %24, %25, %cst_20 {dimension_numbers = #tpu.dot_dimension_numbers<[1], [0], [0], [1], [0, 0, 1, 1], [], []>} : vector<8x128xbf16>, vector<128x128xbf16>, vector<8x128xf32> -> vector<8x128xf32>
    %c0_21 = arith.constant 0 : index
    %c0_22 = arith.constant 0 : index
    %27 = vector.load %arg9[%c0_21, %c0_22] : memref<1x128xf32, #tpu.memory_space<vmem>>, vector<1x128xf32>
    %28 = vector.broadcast %27 : vector<1x128xf32> to vector<8x128xf32>
    %29 = arith.addf %26, %28 : vector<8x128xf32>
    %cst_23 = arith.constant 0.000000e+00 : f32
    %30 = vector.broadcast %cst_23 : f32 to vector<8x128xf32>
    %31 = arith.maximumf %29, %30 : vector<8x128xf32>
    %32 = arith.truncf %31 : vector<8x128xf32> to vector<8x128xbf16>
    %c0_24 = arith.constant 0 : index
    %c0_25 = arith.constant 0 : index
    %33 = vector.load %arg10[%c0_24, %c0_25] : memref<128x256xbf16, #tpu.memory_space<vmem>>, vector<128x256xbf16>
    %cst_26 = arith.constant dense<0.000000e+00> : vector<8x256xf32>
    %34 = tpu.matmul %32, %33, %cst_26 {dimension_numbers = #tpu.dot_dimension_numbers<[1], [0], [0], [1], [0, 0, 1, 1], [], []>} : vector<8x128xbf16>, vector<128x256xbf16>, vector<8x256xf32> -> vector<8x256xf32>
    %c0_27 = arith.constant 0 : index
    %c0_28 = arith.constant 0 : index
    %35 = vector.load %arg11[%c0_27, %c0_28] : memref<1x256xf32, #tpu.memory_space<vmem>>, vector<1x256xf32>
    %36 = vector.broadcast %35 : vector<1x256xf32> to vector<8x256xf32>
    %37 = arith.addf %34, %36 : vector<8x256xf32>
    %cst_29 = arith.constant 0.000000e+00 : f32
    %38 = vector.broadcast %cst_29 : f32 to vector<8x256xf32>
    %39 = arith.maximumf %37, %38 : vector<8x256xf32>
    %40 = arith.truncf %39 : vector<8x256xf32> to vector<8x256xbf16>
    %c0_30 = arith.constant 0 : index
    %c0_31 = arith.constant 0 : index
    %41 = vector.load %arg12[%c0_30, %c0_31] : memref<256x384xbf16, #tpu.memory_space<vmem>>, vector<256x384xbf16>
    %cst_32 = arith.constant dense<0.000000e+00> : vector<8x384xf32>
    %42 = tpu.matmul %40, %41, %cst_32 {dimension_numbers = #tpu.dot_dimension_numbers<[1], [0], [0], [1], [0, 0, 1, 1], [], []>} : vector<8x256xbf16>, vector<256x384xbf16>, vector<8x384xf32> -> vector<8x384xf32>
    %c0_33 = arith.constant 0 : index
    %c0_34 = arith.constant 0 : index
    %43 = vector.load %arg13[%c0_33, %c0_34] : memref<1x384xf32, #tpu.memory_space<vmem>>, vector<1x384xf32>
    %44 = vector.broadcast %43 : vector<1x384xf32> to vector<8x384xf32>
    %45 = arith.addf %42, %44 : vector<8x384xf32>
    %c0_35 = arith.constant 0 : index
    %c0_36 = arith.constant 0 : index
    %46 = vector.load %arg14[%c0_35, %c0_36] : memref<8x384xf32, #tpu.memory_space<vmem>>, vector<8x384xf32>
    tpu.vector_store %arg14[%c0_35, %c0_36], %45 {strides = array<i32>} : memref<8x384xf32, #tpu.memory_space<vmem>>, vector<8x384xf32>,
    return
  }
  func.func @transform_0(%arg0: i32) -> (i32, i32) {
    %c0_i32 = arith.constant 0 : i32
    %c0_i32_0 = arith.constant 0 : i32
    return %arg0, %c0_i32 : i32, i32
  }
  func.func @transform_1(%arg0: i32) -> (i32, i32) {
    %c0_i32 = arith.constant 0 : i32
    %c0_i32_0 = arith.constant 0 : i32
    %c0_i32_1 = arith.constant 0 : i32
    return %c0_i32, %c0_i32_0 : i32, i32
  }
  func.func @transform_2(%arg0: i32) -> (i32, i32) {
    %c0_i32 = arith.constant 0 : i32
    %c0_i32_0 = arith.constant 0 : i32
    %c0_i32_1 = arith.constant 0 : i32
    return %c0_i32, %c0_i32_0 : i32, i32
  }
  func.func @transform_3(%arg0: i32) -> (i32, i32) {
    %c0_i32 = arith.constant 0 : i32
    %c0_i32_0 = arith.constant 0 : i32
    %c0_i32_1 = arith.constant 0 : i32
    return %c0_i32, %c0_i32_0 : i32, i32
  }
  func.func @transform_4(%arg0: i32) -> (i32, i32) {
    %c0_i32 = arith.constant 0 : i32
    %c0_i32_0 = arith.constant 0 : i32
    %c0_i32_1 = arith.constant 0 : i32
    return %c0_i32, %c0_i32_0 : i32, i32
  }
  func.func @transform_5(%arg0: i32) -> (i32, i32) {
    %c0_i32 = arith.constant 0 : i32
    %c0_i32_0 = arith.constant 0 : i32
    %c0_i32_1 = arith.constant 0 : i32
    return %c0_i32, %c0_i32_0 : i32, i32
  }
  func.func @transform_6(%arg0: i32) -> (i32, i32) {
    %c0_i32 = arith.constant 0 : i32
    %c0_i32_0 = arith.constant 0 : i32
    %c0_i32_1 = arith.constant 0 : i32
    return %c0_i32, %c0_i32_0 : i32, i32
  }
  func.func @transform_7(%arg0: i32) -> (i32, i32) {
    %c0_i32 = arith.constant 0 : i32
    %c0_i32_0 = arith.constant 0 : i32
    %c0_i32_1 = arith.constant 0 : i32
    return %c0_i32, %c0_i32_0 : i32, i32
  }
  func.func @transform_8(%arg0: i32) -> (i32, i32) {
    %c0_i32 = arith.constant 0 : i32
    %c0_i32_0 = arith.constant 0 : i32
    %c0_i32_1 = arith.constant 0 : i32
    return %c0_i32, %c0_i32_0 : i32, i32
  }
  func.func @transform_9(%arg0: i32) -> (i32, i32) {
    %c0_i32 = arith.constant 0 : i32
    %c0_i32_0 = arith.constant 0 : i32
    %c0_i32_1 = arith.constant 0 : i32
    return %c0_i32, %c0_i32_0 : i32, i32
  }
  func.func @transform_10(%arg0: i32) -> (i32, i32) {
    %c0_i32 = arith.constant 0 : i32
    %c0_i32_0 = arith.constant 0 : i32
    %c0_i32_1 = arith.constant 0 : i32
    return %c0_i32, %c0_i32_0 : i32, i32
  }
  func.func @transform_11(%arg0: i32) -> (i32, i32) {
    %c0_i32 = arith.constant 0 : i32
    %c0_i32_0 = arith.constant 0 : i32
    %c0_i32_1 = arith.constant 0 : i32
    return %c0_i32, %c0_i32_0 : i32, i32
  }
  func.func @transform_12(%arg0: i32) -> (i32, i32) {
    %c0_i32 = arith.constant 0 : i32
    %c0_i32_0 = arith.constant 0 : i32
    %c0_i32_1 = arith.constant 0 : i32
    return %c0_i32, %c0_i32_0 : i32, i32
  }
  func.func @transform_13(%arg0: i32) -> (i32, i32) {
    %c0_i32 = arith.constant 0 : i32
    %c0_i32_0 = arith.constant 0 : i32
    return %arg0, %c0_i32 : i32, i32
  }
}

</mosaic_0001>

<llo_original>
// kernel: tpu_custom_call.1
$region0: #{tpu_custom_call.1}
  #allocation0 [shape = 'u32[]', space=smem, size = 0x4, offset = 0x4, fixed_abs, tag = 'smem constant byte address 0x4 - core index']
  #allocation1 [shape = 'u32[144,128]{1,0:T(1,128)}', space=vmem, size = 0x12000, scoped, tag = 'internal scratch']
  %s0 = inlined_call_operand.hbm [shape: bf16[8,384], index: 0, kind: input, shape index: {}]
  %s1 = inlined_call_operand.hbm [shape: bf16[384,512], index: 1, kind: input, shape index: {}]
  %s2 = inlined_call_operand.vmem [shape: f32[1,512], index: 2, kind: input, shape index: {}]
  %s3 = inlined_call_operand.hbm [shape: bf16[512,256], index: 3, kind: input, shape index: {}]
  %s4 = inlined_call_operand.vmem [shape: f32[1,256], index: 4, kind: input, shape index: {}]
  %s5 = inlined_call_operand.hbm [shape: bf16[256,128], index: 5, kind: input, shape index: {}]
  %s6 = inlined_call_operand.vmem [shape: f32[1,128], index: 6, kind: input, shape index: {}]
  %s7 = inlined_call_operand.hbm [shape: bf16[128,128], index: 7, kind: input, shape index: {}]
  %s8 = inlined_call_operand.vmem [shape: f32[1,128], index: 8, kind: input, shape index: {}]
  %s9 = inlined_call_operand.hbm [shape: bf16[128,256], index: 9, kind: input, shape index: {}]
  %s10 = inlined_call_operand.vmem [shape: f32[1,256], index: 10, kind: input, shape index: {}]
  %s11 = inlined_call_operand.hbm [shape: bf16[256,384], index: 11, kind: input, shape index: {}]
  %s12 = inlined_call_operand.vmem [shape: f32[1,384], index: 12, kind: input, shape index: {}]
  %s13 = inlined_call_operand.hbm [shape: f32[8,384], index: 13, kind: output, shape index: {}]
  %s14 = sld [smem:[#allocation0]]
  $region90: #{tpu_custom_call.1} parent=0
    _
  %s16 = ssub.s32 1, %s14
  %s17 = scalar_select 0, %s16, %s14
  $region1: #{tpu_custom_call.1} parent=0
    #allocation2 [shape = 'u8[6144]{0}', space=vmem, size = 0x1800, scoped, tag = 'input window, operand 0, single buffered']
    #allocation3 [shape = 's32[1]{0}', space=sflag, size = 0x4, scoped, tag = 'scoped memory for tpu_custom_call.1']
    #allocation4 [shape = 's32[1]{0}', space=sflag, size = 0x4, scoped, tag = 'scoped memory for tpu_custom_call.1']
    #allocation5 [shape = 'u8[393216]{0}', space=vmem, size = 0x60000, scoped, tag = 'input window, operand 1, single buffered']
    #allocation6 [shape = 's32[1]{0}', space=sflag, size = 0x4, scoped, tag = 'scoped memory for tpu_custom_call.1']
    #allocation7 [shape = 'u8[262144]{0}', space=vmem, size = 0x40000, scoped, tag = 'input window, operand 3, single buffered']
    #allocation8 [shape = 'u8[65536]{0}', space=vmem, size = 0x10000, scoped, tag = 'input window, operand 5, single buffered']
    #allocation9 [shape = 's32[1]{0}', space=sflag, size = 0x4, scoped, tag = 'scoped memory for tpu_custom_call.1']
    #allocation10 [shape = 'u8[32768]{0}', space=vmem, size = 0x8000, scoped, tag = 'input window, operand 7, single buffered']
    #allocation11 [shape = 'u8[65536]{0}', space=vmem, size = 0x10000, scoped, tag = 'input window, operand 9, single buffered']
    #allocation12 [shape = 's32[1]{0}', space=sflag, size = 0x4, scoped, tag = 'scoped memory for tpu_custom_call.1']
    #allocation13 [shape = 'u8[196608]{0}', space=vmem, size = 0x30000, scoped, tag = 'input window, operand 11, single buffered']
    #allocation14 [shape = 'u8[12288]{0}', space=vmem, size = 0x3000, scoped, tag = 'output window, operand 0, single buffered']
    %18 = vsyncpa [#allocation3], 0
    %19 = vsyncpa [#allocation6], 0
    %20 = vsyncpa [#allocation9], 0
    %21 = vsyncpa [#allocation12], 0
    %22 = vsyncpa [#allocation4], 0
    // Predicated region
    $region2: #{tpu_custom_call.1} parent=1 // pred_check
      _
    $region3: #{tpu_custom_call.1} parent=1 // pred_check_branch
      %24 = sbr.rel (0) target = $region5
    $region4: #{tpu_custom_call.1} parent=1 // pred_region
      %s26 = ssub.s32 192, 192
      %27 = vsyncadd [#allocation3], %s26
      %s29 = sshll.u32 [#allocation2], 4
      %s30 = int_to_ptr.vmem [resolvable:$true] %s29
      %32 = dma.hbm_to_vmem [thread:$0]  %s0, 192, %s30, [#allocation3]
    $region5: #{tpu_custom_call.1} parent=1 // pred_fallthru
      _
    // Predicated region
    $region6: #{tpu_custom_call.1} parent=1 // pred_check
      _
    $region7: #{tpu_custom_call.1} parent=1 // pred_check_branch
      %34 = sbr.rel (0) target = $region9
    $region8: #{tpu_custom_call.1} parent=1 // pred_region
      %s36 = ssub.s32 12288, 12288
      %37 = vsyncadd [#allocation6], %s36
      %s38 = sshll.u32 [#allocation5], 4
      %s39 = int_to_ptr.vmem [resolvable:$true] %s38
      %44 = dma.hbm_to_vmem [thread:$0]  %s1, 12288, %s39, [#allocation6], 256, 256, 16
    $region9: #{tpu_custom_call.1} parent=1 // pred_fallthru
      _
    // Predicated region
    $region10: #{tpu_custom_call.1} parent=1 // pred_check
      _
    $region11: #{tpu_custom_call.1} parent=1 // pred_check_branch
      %46 = sbr.rel (0) target = $region13
    $region12: #{tpu_custom_call.1} parent=1 // pred_region
      _
    $region13: #{tpu_custom_call.1} parent=1 // pred_fallthru
      _
    // Predicated region
    $region14: #{tpu_custom_call.1} parent=1 // pred_check
      _
    $region15: #{tpu_custom_call.1} parent=1 // pred_check_branch
      %48 = sbr.rel (0) target = $region17
    $region16: #{tpu_custom_call.1} parent=1 // pred_region
      %s50 = ssub.s32 8192, 8192
      %51 = vsyncadd [#allocation6], %s50
      %s52 = sshll.u32 [#allocation7], 4
      %s53 = int_to_ptr.vmem [resolvable:$true] %s52
      %58 = dma.hbm_to_vmem [thread:$0]  %s3, 8192, %s53, [#allocation6], 128, 128, 8
    $region17: #{tpu_custom_call.1} parent=1 // pred_fallthru
      _
    // Predicated region
    $region18: #{tpu_custom_call.1} parent=1 // pred_check
      _
    $region19: #{tpu_custom_call.1} parent=1 // pred_check_branch
      %60 = sbr.rel (0) target = $region21
    $region20: #{tpu_custom_call.1} parent=1 // pred_region
      _
    $region21: #{tpu_custom_call.1} parent=1 // pred_fallthru
      _
    // Predicated region
    $region22: #{tpu_custom_call.1} parent=1 // pred_check
      _
    $region23: #{tpu_custom_call.1} parent=1 // pred_check_branch
      %62 = sbr.rel (0) target = $region25
    $region24: #{tpu_custom_call.1} parent=1 // pred_region
      %s64 = ssub.s32 2048, 2048
      %65 = vsyncadd [#allocation9], %s64
      %s66 = sshll.u32 [#allocation8], 4
      %s67 = int_to_ptr.vmem [resolvable:$true] %s66
      %72 = dma.hbm_to_vmem [thread:$0]  %s5, 2048, %s67, [#allocation9], 64, 64, 4
    $region25: #{tpu_custom_call.1} parent=1 // pred_fallthru
      _
    // Predicated region
    $region26: #{tpu_custom_call.1} parent=1 // pred_check
      _
    $region27: #{tpu_custom_call.1} parent=1 // pred_check_branch
      %74 = sbr.rel (0) target = $region29
    $region28: #{tpu_custom_call.1} parent=1 // pred_region
      _
    $region29: #{tpu_custom_call.1} parent=1 // pred_fallthru
      _
    // Predicated region
    $region30: #{tpu_custom_call.1} parent=1 // pred_check
      _
    $region31: #{tpu_custom_call.1} parent=1 // pred_check_branch
      %76 = sbr.rel (0) target = $region33
    $region32: #{tpu_custom_call.1} parent=1 // pred_region
      %s78 = ssub.s32 1024, 1024
      %79 = vsyncadd [#allocation9], %s78
      %s80 = sshll.u32 [#allocation10], 4
      %s81 = int_to_ptr.vmem [resolvable:$true] %s80
      %86 = dma.hbm_to_vmem [thread:$0]  %s7, 1024, %s81, [#allocation9], 64, 64, 4
    $region33: #{tpu_custom_call.1} parent=1 // pred_fallthru
      _
    // Predicated region
    $region34: #{tpu_custom_call.1} parent=1 // pred_check
      _
    $region35: #{tpu_custom_call.1} parent=1 // pred_check_branch
      %88 = sbr.rel (0) target = $region37
    $region36: #{tpu_custom_call.1} parent=1 // pred_region
      _
    $region37: #{tpu_custom_call.1} parent=1 // pred_fallthru
      _
    // Predicated region
    $region38: #{tpu_custom_call.1} parent=1 // pred_check
      _
    $region39: #{tpu_custom_call.1} parent=1 // pred_check_branch
      %90 = sbr.rel (0) target = $region41
    $region40: #{tpu_custom_call.1} parent=1 // pred_region
      %s92 = ssub.s32 2048, 2048
      %93 = vsyncadd [#allocation12], %s92
      %s94 = sshll.u32 [#allocation11], 4
      %s95 = int_to_ptr.vmem [resolvable:$true] %s94
      %100 = dma.hbm_to_vmem [thread:$0]  %s9, 2048, %s95, [#allocation12], 128, 128, 8
    $region41: #{tpu_custom_call.1} parent=1 // pred_fallthru
      _
    // Predicated region
    $region42: #{tpu_custom_call.1} parent=1 // pred_check
      _
    $region43: #{tpu_custom_call.1} parent=1 // pred_check_branch
      %102 = sbr.rel (0) target = $region45
    $region44: #{tpu_custom_call.1} parent=1 // pred_region
      _
    $region45: #{tpu_custom_call.1} parent=1 // pred_fallthru
      _
    // Predicated region
    $region46: #{tpu_custom_call.1} parent=1 // pred_check
      _
    $region47: #{tpu_custom_call.1} parent=1 // pred_check_branch
      %104 = sbr.rel (0) target = $region49
    $region48: #{tpu_custom_call.1} parent=1 // pred_region
      %s106 = ssub.s32 6144, 6144
      %107 = vsyncadd [#allocation12], %s106
      %s108 = sshll.u32 [#allocation13], 4
      %s109 = int_to_ptr.vmem [resolvable:$true] %s108
      %114 = dma.hbm_to_vmem [thread:$0]  %s11, 6144, %s109, [#allocation12], 192, 192, 12
    $region49: #{tpu_custom_call.1} parent=1 // pred_fallthru
      _
    // Predicated region
    $region50: #{tpu_custom_call.1} parent=1 // pred_check
      _
    $region51: #{tpu_custom_call.1} parent=1 // pred_check_branch
      %116 = sbr.rel (0) target = $region53
    $region52: #{tpu_custom_call.1} parent=1 // pred_region
      _
    $region53: #{tpu_custom_call.1} parent=1 // pred_fallthru
      _
    // Predicated region
    $region54: #{tpu_custom_call.1} parent=1 // pred_check
      _
    $region55: #{tpu_custom_call.1} parent=1 // pred_check_branch
      %118 = sbr.rel (0) target = $region57
    $region56: #{tpu_custom_call.1} parent=1 // pred_region
      %119 = dma.done [#allocation3], 192
    $region57: #{tpu_custom_call.1} parent=1 // pred_fallthru
      _
    // Predicated region
    $region58: #{tpu_custom_call.1} parent=1 // pred_check
      _
    $region59: #{tpu_custom_call.1} parent=1 // pred_check_branch
      %121 = sbr.rel (0) target = $region61
    $region60: #{tpu_custom_call.1} parent=1 // pred_region
      %122 = dma.done [#allocation6], 12288
    $region61: #{tpu_custom_call.1} parent=1 // pred_fallthru
      _
    // Predicated region
    $region62: #{tpu_custom_call.1} parent=1 // pred_check
      _
    $region63: #{tpu_custom_call.1} parent=1 // pred_check_branch
      %124 = sbr.rel (0) target = $region65
    $region64: #{tpu_custom_call.1} parent=1 // pred_region
      %125 = dma.done [#allocation6], 8192
    $region65: #{tpu_custom_call.1} parent=1 // pred_fallthru
      _
    // Predicated region
    $region66: #{tpu_custom_call.1} parent=1 // pred_check
      _
    $region67: #{tpu_custom_call.1} parent=1 // pred_check_branch
      %127 = sbr.rel (0) target = $region69
    $region68: #{tpu_custom_call.1} parent=1 // pred_region
      %128 = dma.done [#allocation9], 2048
    $region69: #{tpu_custom_call.1} parent=1 // pred_fallthru
      _
    // Predicated region
    $region70: #{tpu_custom_call.1} parent=1 // pred_check
      _
    $region71: #{tpu_custom_call.1} parent=1 // pred_check_branch
      %130 = sbr.rel (0) target = $region73
    $region72: #{tpu_custom_call.1} parent=1 // pred_region
      %131 = dma.done [#allocation9], 1024
    $region73: #{tpu_custom_call.1} parent=1 // pred_fallthru
      _
    // Predicated region
    $region74: #{tpu_custom_call.1} parent=1 // pred_check
      _
    $region75: #{tpu_custom_call.1} parent=1 // pred_check_branch
      %133 = sbr.rel (0) target = $region77
    $region76: #{tpu_custom_call.1} parent=1 // pred_region
      %134 = dma.done [#allocation12], 2048
    $region77: #{tpu_custom_call.1} parent=1 // pred_fallthru
      _
    // Predicated region
    $region78: #{tpu_custom_call.1} parent=1 // pred_check
      _
    $region79: #{tpu_custom_call.1} parent=1 // pred_check_branch
      %136 = sbr.rel (0) target = $region81
    $region80: #{tpu_custom_call.1} parent=1 // pred_region
      %137 = dma.done [#allocation12], 6144
    $region81: #{tpu_custom_call.1} parent=1 // pred_fallthru
      _
    %v139 = vld [vmem:[#allocation2] sm:$0xff]
    %v140 = vld [vmem:[#allocation2 + $0x8] sm:$0xf]
    %v141 = vld [vmem:[#allocation5] sm:$0xff]
    %v142 = vld [vmem:[#allocation5 + $0x8] sm:$0xff]
    %v143 = vld [vmem:[#allocation5 + $0x10] sm:$0xff]
    %v144 = vld [vmem:[#allocation5 + $0x18] sm:$0xff]
    %v145 = vld [vmem:[#allocation5 + $0x20] sm:$0xff]
    %v146 = vld [vmem:[#allocation5 + $0x28] sm:$0xff]
    %v147 = vld [vmem:[#allocation5 + $0x30] sm:$0xff]
    %v148 = vld [vmem:[#allocation5 + $0x38] sm:$0xff]
    %v149 = vld [vmem:[#allocation5 + $0x40] sm:$0xff]
    %v150 = vld [vmem:[#allocation5 + $0x48] sm:$0xff]
    %v151 = vld [vmem:[#allocation5 + $0x50] sm:$0xff]
    %v152 = vld [vmem:[#allocation5 + $0x58] sm:$0xff]
    %v153 = vld [vmem:[#allocation5 + $0x60] sm:$0xff]
    %v154 = vld [vmem:[#allocation5 + $0x68] sm:$0xff]
    %v155 = vld [vmem:[#allocation5 + $0x70] sm:$0xff]
    %v156 = vld [vmem:[#allocation5 + $0x78] sm:$0xff]
    %v157 = vld [vmem:[#allocation5 + $0x80] sm:$0xff]
    %v158 = vld [vmem:[#allocation5 + $0x88] sm:$0xff]
    %v159 = vld [vmem:[#allocation5 + $0x90] sm:$0xff]
    %v160 = vld [vmem:[#allocation5 + $0x98] sm:$0xff]
    %v161 = vld [vmem:[#allocation5 + $0xa0] sm:$0xff]
    %v162 = vld [vmem:[#allocation5 + $0xa8] sm:$0xff]
    %v163 = vld [vmem:[#allocation5 + $0xb0] sm:$0xff]
    %v164 = vld [vmem:[#allocation5 + $0xb8] sm:$0xff]
    %v165 = vld [vmem:[#allocation5 + $0xc0] sm:$0xff]
    %v166 = vld [vmem:[#allocation5 + $0xc8] sm:$0xff]
    %v167 = vld [vmem:[#allocation5 + $0xd0] sm:$0xff]
    %v168 = vld [vmem:[#allocation5 + $0xd8] sm:$0xff]
    %v169 = vld [vmem:[#allocation5 + $0xe0] sm:$0xff]
    %v170 = vld [vmem:[#allocation5 + $0xe8] sm:$0xff]
    %v171 = vld [vmem:[#allocation5 + $0xf0] sm:$0xff]
    %v172 = vld [vmem:[#allocation5 + $0xf8] sm:$0xff]
    %v173 = vld [vmem:[#allocation5 + $0x100] sm:$0xff]
    %v174 = vld [vmem:[#allocation5 + $0x108] sm:$0xff]
    %v175 = vld [vmem:[#allocation5 + $0x110] sm:$0xff]
    %v176 = vld [vmem:[#allocation5 + $0x118] sm:$0xff]
    %v177 = vld [vmem:[#allocation5 + $0x120] sm:$0xff]
    %v178 = vld [vmem:[#allocation5 + $0x128] sm:$0xff]
    %v179 = vld [vmem:[#allocation5 + $0x130] sm:$0xff]
    %v180 = vld [vmem:[#allocation5 + $0x138] sm:$0xff]
    %v181 = vld [vmem:[#allocation5 + $0x140] sm:$0xff]
    %v182 = vld [vmem:[#allocation5 + $0x148] sm:$0xff]
    %v183 = vld [vmem:[#allocation5 + $0x150] sm:$0xff]
    %v184 = vld [vmem:[#allocation5 + $0x158] sm:$0xff]
    %v185 = vld [vmem:[#allocation5 + $0x160] sm:$0xff]
    %v186 = vld [vmem:[#allocation5 + $0x168] sm:$0xff]
    %v187 = vld [vmem:[#allocation5 + $0x170] sm:$0xff]
    %v188 = vld [vmem:[#allocation5 + $0x178] sm:$0xff]
    %v189 = vld [vmem:[#allocation5 + $0x180] sm:$0xff]
    %v190 = vld [vmem:[#allocation5 + $0x188] sm:$0xff]
    %v191 = vld [vmem:[#allocation5 + $0x190] sm:$0xff]
    %v192 = vld [vmem:[#allocation5 + $0x198] sm:$0xff]
    %v193 = vld [vmem:[#allocation5 + $0x1a0] sm:$0xff]
    %v194 = vld [vmem:[#allocation5 + $0x1a8] sm:$0xff]
    %v195 = vld [vmem:[#allocation5 + $0x1b0] sm:$0xff]
    %v196 = vld [vmem:[#allocation5 + $0x1b8] sm:$0xff]
    %v197 = vld [vmem:[#allocation5 + $0x1c0] sm:$0xff]
    %v198 = vld [vmem:[#allocation5 + $0x1c8] sm:$0xff]
    %v199 = vld [vmem:[#allocation5 + $0x1d0] sm:$0xff]
    %v200 = vld [vmem:[#allocation5 + $0x1d8] sm:$0xff]
    %v201 = vld [vmem:[#allocation5 + $0x1e0] sm:$0xff]
    %v202 = vld [vmem:[#allocation5 + $0x1e8] sm:$0xff]
    %v203 = vld [vmem:[#allocation5 + $0x1f0] sm:$0xff]
    %v204 = vld [vmem:[#allocation5 + $0x1f8] sm:$0xff]
    %v205 = vld [vmem:[#allocation5 + $0x200] sm:$0xff]
    %v206 = vld [vmem:[#allocation5 + $0x208] sm:$0xff]
    %v207 = vld [vmem:[#allocation5 + $0x210] sm:$0xff]
    %v208 = vld [vmem:[#allocation5 + $0x218] sm:$0xff]
    %v209 = vld [vmem:[#allocation5 + $0x220] sm:$0xff]
    %v210 = vld [vmem:[#allocation5 + $0x228] sm:$0xff]
    %v211 = vld [vmem:[#allocation5 + $0x230] sm:$0xff]
    %v212 = vld [vmem:[#allocation5 + $0x238] sm:$0xff]
    %v213 = vld [vmem:[#allocation5 + $0x240] sm:$0xff]
    %v214 = vld [vmem:[#allocation5 + $0x248] sm:$0xff]
    %v215 = vld [vmem:[#allocation5 + $0x250] sm:$0xff]
    %v216 = vld [vmem:[#allocation5 + $0x258] sm:$0xff]
    %v217 = vld [vmem:[#allocation5 + $0x260] sm:$0xff]
    %v218 = vld [vmem:[#allocation5 + $0x268] sm:$0xff]
    %v219 = vld [vmem:[#allocation5 + $0x270] sm:$0xff]
    %v220 = vld [vmem:[#allocation5 + $0x278] sm:$0xff]
    %v221 = vld [vmem:[#allocation5 + $0x280] sm:$0xff]
    %v222 = vld [vmem:[#allocation5 + $0x288] sm:$0xff]
    %v223 = vld [vmem:[#allocation5 + $0x290] sm:$0xff]
    %v224 = vld [vmem:[#allocation5 + $0x298] sm:$0xff]
    %v225 = vld [vmem:[#allocation5 + $0x2a0] sm:$0xff]
    %v226 = vld [vmem:[#allocation5 + $0x2a8] sm:$0xff]
    %v227 = vld [vmem:[#allocation5 + $0x2b0] sm:$0xff]
    %v228 = vld [vmem:[#allocation5 + $0x2b8] sm:$0xff]
    %v229 = vld [vmem:[#allocation5 + $0x2c0] sm:$0xff]
    %v230 = vld [vmem:[#allocation5 + $0x2c8] sm:$0xff]
    %v231 = vld [vmem:[#allocation5 + $0x2d0] sm:$0xff]
    %v232 = vld [vmem:[#allocation5 + $0x2d8] sm:$0xff]
    %v233 = vld [vmem:[#allocation5 + $0x2e0] sm:$0xff]
    %v234 = vld [vmem:[#allocation5 + $0x2e8] sm:$0xff]
    %v235 = vld [vmem:[#allocation5 + $0x2f0] sm:$0xff]
    %v236 = vld [vmem:[#allocation5 + $0x2f8] sm:$0xff]
    %v237 = vld [vmem:[%s2] sm:$0xf]
    %v239 = vlaneseq
    %v240 = vshrl.u32 %v239, 7
    %v241 = vsub.s32 0, %v240
    %v242 = vrot.slane %v237, %v241
    %v243 = vlaneseq
    %v244 = vshrl.u32 %v243, 7
    %v245 = vsub.s32 1, %v244
    %v246 = vrot.slane %v237, %v245
    %v247 = vlaneseq
    %v248 = vshrl.u32 %v247, 7
    %v249 = vsub.s32 2, %v248
    %v250 = vrot.slane %v237, %v249
    %v251 = vlaneseq
    %v252 = vshrl.u32 %v251, 7
    %v253 = vsub.s32 3, %v252
    %v254 = vrot.slane %v237, %v253
    %v261 = vunpack.c.l.b16 %v139
    %v262 = vunpack.c.h.b16 %v139
    %v263 = vunpack.c.l.b16 %v140
    %v264 = vpack.c.b16 %v261, %v261
    %v265 = vpack.c.b16 %v262, %v262
    %v266 = vpack.c.b16 %v263, %v263
    %v366 = vunpack.c.l.b16 %v141
    %v367 = vunpack.c.h.b16 %v141
    %v368 = vunpack.c.l.b16 %v142
    %v369 = vunpack.c.h.b16 %v142
    %v370 = vunpack.c.l.b16 %v143
    %v371 = vunpack.c.h.b16 %v143
    %v372 = vunpack.c.l.b16 %v144
    %v373 = vunpack.c.h.b16 %v144
    %v374 = vunpack.c.l.b16 %v145
    %v375 = vunpack.c.h.b16 %v145
    %v376 = vunpack.c.l.b16 %v146
    %v377 = vunpack.c.h.b16 %v146
    %v378 = vunpack.c.l.b16 %v147
    %v379 = vunpack.c.h.b16 %v147
    %v380 = vunpack.c.l.b16 %v148
    %v381 = vunpack.c.h.b16 %v148
    %v382 = vunpack.c.l.b16 %v149
    %v383 = vunpack.c.h.b16 %v149
    %v384 = vunpack.c.l.b16 %v150
    %v385 = vunpack.c.h.b16 %v150
    %v386 = vunpack.c.l.b16 %v151
    %v387 = vunpack.c.h.b16 %v151
    %v388 = vunpack.c.l.b16 %v152
    %v389 = vunpack.c.h.b16 %v152
    %v390 = vunpack.c.l.b16 %v153
    %v391 = vunpack.c.h.b16 %v153
    %v392 = vunpack.c.l.b16 %v154
    %v393 = vunpack.c.h.b16 %v154
    %v394 = vunpack.c.l.b16 %v155
    %v395 = vunpack.c.h.b16 %v155
    %v396 = vunpack.c.l.b16 %v156
    %v397 = vunpack.c.h.b16 %v156
    %v398 = vunpack.c.l.b16 %v157
    %v399 = vunpack.c.h.b16 %v157
    %v400 = vunpack.c.l.b16 %v158
    %v401 = vunpack.c.h.b16 %v158
    %v402 = vunpack.c.l.b16 %v159
    %v403 = vunpack.c.h.b16 %v159
    %v404 = vunpack.c.l.b16 %v160
    %v405 = vunpack.c.h.b16 %v160
    %v406 = vunpack.c.l.b16 %v161
    %v407 = vunpack.c.h.b16 %v161
    %v408 = vunpack.c.l.b16 %v162
    %v409 = vunpack.c.h.b16 %v162
    %v410 = vunpack.c.l.b16 %v163
    %v411 = vunpack.c.h.b16 %v163
    %v412 = vunpack.c.l.b16 %v164
    %v413 = vunpack.c.h.b16 %v164
    %v414 = vunpack.c.l.b16 %v165
    %v415 = vunpack.c.h.b16 %v165
    %v416 = vunpack.c.l.b16 %v166
    %v417 = vunpack.c.h.b16 %v166
    %v418 = vunpack.c.l.b16 %v167
    %v419 = vunpack.c.h.b16 %v167
    %v420 = vunpack.c.l.b16 %v168
    %v421 = vunpack.c.h.b16 %v168
    %v422 = vunpack.c.l.b16 %v169
    %v423 = vunpack.c.h.b16 %v169
    %v424 = vunpack.c.l.b16 %v170
    %v425 = vunpack.c.h.b16 %v170
    %v426 = vunpack.c.l.b16 %v171
    %v427 = vunpack.c.h.b16 %v171
    %v428 = vunpack.c.l.b16 %v172
    %v429 = vunpack.c.h.b16 %v172
    %v430 = vunpack.c.l.b16 %v173
    %v431 = vunpack.c.h.b16 %v173
    %v432 = vunpack.c.l.b16 %v174
    %v433 = vunpack.c.h.b16 %v174
    %v434 = vunpack.c.l.b16 %v175
    %v435 = vunpack.c.h.b16 %v175
    %v436 = vunpack.c.l.b16 %v176
    %v437 = vunpack.c.h.b16 %v176
    %v438 = vunpack.c.l.b16 %v177
    %v439 = vunpack.c.h.b16 %v177
    %v440 = vunpack.c.l.b16 %v178
    %v441 = vunpack.c.h.b16 %v178
    %v442 = vunpack.c.l.b16 %v179
    %v443 = vunpack.c.h.b16 %v179
    %v444 = vunpack.c.l.b16 %v180
    %v445 = vunpack.c.h.b16 %v180
    %v446 = vunpack.c.l.b16 %v181
    %v447 = vunpack.c.h.b16 %v181
    %v448 = vunpack.c.l.b16 %v182
    %v449 = vunpack.c.h.b16 %v182
    %v450 = vunpack.c.l.b16 %v183
    %v451 = vunpack.c.h.b16 %v183
    %v452 = vunpack.c.l.b16 %v184
    %v453 = vunpack.c.h.b16 %v184
    %v454 = vunpack.c.l.b16 %v185
    %v455 = vunpack.c.h.b16 %v185
    %v456 = vunpack.c.l.b16 %v186
    %v457 = vunpack.c.h.b16 %v186
    %v458 = vunpack.c.l.b16 %v187
    %v459 = vunpack.c.h.b16 %v187
    %v460 = vunpack.c.l.b16 %v188
    %v461 = vunpack.c.h.b16 %v188
    %v462 = vunpack.c.l.b16 %v189
    %v463 = vunpack.c.h.b16 %v189
    %v464 = vunpack.c.l.b16 %v190
    %v465 = vunpack.c.h.b16 %v190
    %v466 = vunpack.c.l.b16 %v191
    %v467 = vunpack.c.h.b16 %v191
    %v468 = vunpack.c.l.b16 %v192
    %v469 = vunpack.c.h.b16 %v192
    %v470 = vunpack.c.l.b16 %v193
    %v471 = vunpack.c.h.b16 %v193
    %v472 = vunpack.c.l.b16 %v194
    %v473 = vunpack.c.h.b16 %v194
    %v474 = vunpack.c.l.b16 %v195
    %v475 = vunpack.c.h.b16 %v195
    %v476 = vunpack.c.l.b16 %v196
    %v477 = vunpack.c.h.b16 %v196
    %v478 = vunpack.c.l.b16 %v197
    %v479 = vunpack.c.h.b16 %v197
    %v480 = vunpack.c.l.b16 %v198
    %v481 = vunpack.c.h.b16 %v198
    %v482 = vunpack.c.l.b16 %v199
    %v483 = vunpack.c.h.b16 %v199
    %v484 = vunpack.c.l.b16 %v200
    %v485 = vunpack.c.h.b16 %v200
    %v486 = vunpack.c.l.b16 %v201
    %v487 = vunpack.c.h.b16 %v201
    %v488 = vunpack.c.l.b16 %v202
    %v489 = vunpack.c.h.b16 %v202
    %v490 = vunpack.c.l.b16 %v203
    %v491 = vunpack.c.h.b16 %v203
    %v492 = vunpack.c.l.b16 %v204
    %v493 = vunpack.c.h.b16 %v204
    %v494 = vunpack.c.l.b16 %v205
    %v495 = vunpack.c.h.b16 %v205
    %v496 = vunpack.c.l.b16 %v206
    %v497 = vunpack.c.h.b16 %v206
    %v498 = vunpack.c.l.b16 %v207
    %v499 = vunpack.c.h.b16 %v207
    %v500 = vunpack.c.l.b16 %v208
    %v501 = vunpack.c.h.b16 %v208
    %v502 = vunpack.c.l.b16 %v209
    %v503 = vunpack.c.h.b16 %v209
    %v504 = vunpack.c.l.b16 %v210
    %v505 = vunpack.c.h.b16 %v210
    %v506 = vunpack.c.l.b16 %v211
    %v507 = vunpack.c.h.b16 %v211
    %v508 = vunpack.c.l.b16 %v212
    %v509 = vunpack.c.h.b16 %v212
    %v510 = vunpack.c.l.b16 %v213
    %v511 = vunpack.c.h.b16 %v213
    %v512 = vunpack.c.l.b16 %v214
    %v513 = vunpack.c.h.b16 %v214
    %v514 = vunpack.c.l.b16 %v215
    %v515 = vunpack.c.h.b16 %v215
    %v516 = vunpack.c.l.b16 %v216
    %v517 = vunpack.c.h.b16 %v216
    %v518 = vunpack.c.l.b16 %v217
    %v519 = vunpack.c.h.b16 %v217
    %v520 = vunpack.c.l.b16 %v218
    %v521 = vunpack.c.h.b16 %v218
    %v522 = vunpack.c.l.b16 %v219
    %v523 = vunpack.c.h.b16 %v219
    %v524 = vunpack.c.l.b16 %v220
    %v525 = vunpack.c.h.b16 %v220
    %v526 = vunpack.c.l.b16 %v221
    %v527 = vunpack.c.h.b16 %v221
    %v528 = vunpack.c.l.b16 %v222
    %v529 = vunpack.c.h.b16 %v222
    %v530 = vunpack.c.l.b16 %v223
    %v531 = vunpack.c.h.b16 %v223
    %v532 = vunpack.c.l.b16 %v224
    %v533 = vunpack.c.h.b16 %v224
    %v534 = vunpack.c.l.b16 %v225
    %v535 = vunpack.c.h.b16 %v225
    %v536 = vunpack.c.l.b16 %v226
    %v537 = vunpack.c.h.b16 %v226
    %v538 = vunpack.c.l.b16 %v227
    %v539 = vunpack.c.h.b16 %v227
    %v540 = vunpack.c.l.b16 %v228
    %v541 = vunpack.c.h.b16 %v228
    %v542 = vunpack.c.l.b16 %v229
    %v543 = vunpack.c.h.b16 %v229
    %v544 = vunpack.c.l.b16 %v230
    %v545 = vunpack.c.h.b16 %v230
    %v546 = vunpack.c.l.b16 %v231
    %v547 = vunpack.c.h.b16 %v231
    %v548 = vunpack.c.l.b16 %v232
    %v549 = vunpack.c.h.b16 %v232
    %v550 = vunpack.c.l.b16 %v233
    %v551 = vunpack.c.h.b16 %v233
    %v552 = vunpack.c.l.b16 %v234
    %v553 = vunpack.c.h.b16 %v234
    %v554 = vunpack.c.l.b16 %v235
    %v555 = vunpack.c.h.b16 %v235
    %v556 = vunpack.c.l.b16 %v236
    %v557 = vunpack.c.h.b16 %v236
    %v558 = vpack.c.b16 %v370, %v366
    %v559 = vpack.c.b16 %v371, %v367
    %v560 = vpack.c.b16 %v372, %v368
    %v561 = vpack.c.b16 %v373, %v369
    %v562 = vpack.c.b16 %v378, %v374
    %v563 = vpack.c.b16 %v379, %v375
    %v564 = vpack.c.b16 %v380, %v376
    %v565 = vpack.c.b16 %v381, %v377
    %v566 = vpack.c.b16 %v386, %v382
    %v567 = vpack.c.b16 %v387, %v383
    %v568 = vpack.c.b16 %v388, %v384
    %v569 = vpack.c.b16 %v389, %v385
    %v570 = vpack.c.b16 %v394, %v390
    %v571 = vpack.c.b16 %v395, %v391
    %v572 = vpack.c.b16 %v396, %v392
    %v573 = vpack.c.b16 %v397, %v393
    %v574 = vpack.c.b16 %v402, %v398
    %v575 = vpack.c.b16 %v403, %v399
    %v576 = vpack.c.b16 %v404, %v400
    %v577 = vpack.c.b16 %v405, %v401
    %v578 = vpack.c.b16 %v410, %v406
    %v579 = vpack.c.b16 %v411, %v407
    %v580 = vpack.c.b16 %v412, %v408
    %v581 = vpack.c.b16 %v413, %v409
    %v582 = vpack.c.b16 %v418, %v414
    %v583 = vpack.c.b16 %v419, %v415
    %v584 = vpack.c.b16 %v420, %v416
    %v585 = vpack.c.b16 %v421, %v417
    %v586 = vpack.c.b16 %v426, %v422
    %v587 = vpack.c.b16 %v427, %v423
    %v588 = vpack.c.b16 %v428, %v424
    %v589 = vpack.c.b16 %v429, %v425
    %v590 = vpack.c.b16 %v434, %v430
    %v591 = vpack.c.b16 %v435, %v431
    %v592 = vpack.c.b16 %v436, %v432
    %v593 = vpack.c.b16 %v437, %v433
    %v594 = vpack.c.b16 %v442, %v438
    %v595 = vpack.c.b16 %v443, %v439
    %v596 = vpack.c.b16 %v444, %v440
    %v597 = vpack.c.b16 %v445, %v441
    %v598 = vpack.c.b16 %v450, %v446
    %v599 = vpack.c.b16 %v451, %v447
    %v600 = vpack.c.b16 %v452, %v448
    %v601 = vpack.c.b16 %v453, %v449
    %v602 = vpack.c.b16 %v458, %v454
    %v603 = vpack.c.b16 %v459, %v455
    %v604 = vpack.c.b16 %v460, %v456
    %v605 = vpack.c.b16 %v461, %v457
    %v606 = vpack.c.b16 %v466, %v462
    %v607 = vpack.c.b16 %v467, %v463
    %v608 = vpack.c.b16 %v468, %v464
    %v609 = vpack.c.b16 %v469, %v465
    %v610 = vpack.c.b16 %v474, %v470
    %v611 = vpack.c.b16 %v475, %v471
    %v612 = vpack.c.b16 %v476, %v472
    %v613 = vpack.c.b16 %v477, %v473
    %v614 = vpack.c.b16 %v482, %v478
    %v615 = vpack.c.b16 %v483, %v479
    %v616 = vpack.c.b16 %v484, %v480
    %v617 = vpack.c.b16 %v485, %v481
    %v618 = vpack.c.b16 %v490, %v486
    %v619 = vpack.c.b16 %v491, %v487
    %v620 = vpack.c.b16 %v492, %v488
    %v621 = vpack.c.b16 %v493, %v489
    %v622 = vpack.c.b16 %v498, %v494
    %v623 = vpack.c.b16 %v499, %v495
    %v624 = vpack.c.b16 %v500, %v496
    %v625 = vpack.c.b16 %v501, %v497
    %v626 = vpack.c.b16 %v506, %v502
    %v627 = vpack.c.b16 %v507, %v503
    %v628 = vpack.c.b16 %v508, %v504
    %v629 = vpack.c.b16 %v509, %v505
    %v630 = vpack.c.b16 %v514, %v510
    %v631 = vpack.c.b16 %v515, %v511
    %v632 = vpack.c.b16 %v516, %v512
    %v633 = vpack.c.b16 %v517, %v513
    %v634 = vpack.c.b16 %v522, %v518
    %v635 = vpack.c.b16 %v523, %v519
    %v636 = vpack.c.b16 %v524, %v520
    %v637 = vpack.c.b16 %v525, %v521
    %v638 = vpack.c.b16 %v530, %v526
    %v639 = vpack.c.b16 %v531, %v527
    %v640 = vpack.c.b16 %v532, %v528
    %v641 = vpack.c.b16 %v533, %v529
    %v642 = vpack.c.b16 %v538, %v534
    %v643 = vpack.c.b16 %v539, %v535
    %v644 = vpack.c.b16 %v540, %v536
    %v645 = vpack.c.b16 %v541, %v537
    %v646 = vpack.c.b16 %v546, %v542
    %v647 = vpack.c.b16 %v547, %v543
    %v648 = vpack.c.b16 %v548, %v544
    %v649 = vpack.c.b16 %v549, %v545
    %v650 = vpack.c.b16 %v554, %v550
    %v651 = vpack.c.b16 %v555, %v551
    %v652 = vpack.c.b16 %v556, %v552
    %v653 = vpack.c.b16 %v557, %v553
    %750 = vmatprep.subr.bf16.mxu0 %v559
    %751 = vmatpush1.bf16.msra.mxu0 %v558
    %752 = vmatprep.subr.bf16.mxu0 %v563
    %753 = vmatpush1.bf16.msra.mxu0 %v562
    %754 = vmatprep.subr.bf16.mxu0 %v567
    %755 = vmatpush1.bf16.msra.mxu0 %v566
    %756 = vmatprep.subr.bf16.mxu0 %v571
    %757 = vmatpush1.bf16.msra.mxu0 %v570
    %758 = vmatprep.subr.bf16.mxu0 %v575
    %759 = vmatpush1.bf16.msra.mxu0 %v574
    %760 = vmatprep.subr.bf16.mxu0 %v579
    %761 = vmatpush1.bf16.msra.mxu0 %v578
    %762 = vmatprep.subr.bf16.mxu0 %v583
    %763 = vmatpush1.bf16.msra.mxu0 %v582
    %764 = vmatprep.subr.bf16.mxu0 %v587
    %765 = vmatpush1.bf16.msra.mxu0 %v586
    %766 = vmatprep.subr.bf16.mxu0 %v591
    %767 = vmatpush1.bf16.msra.mxu0 %v590
    %768 = vmatprep.subr.bf16.mxu0 %v595
    %769 = vmatpush1.bf16.msra.mxu0 %v594
    %770 = vmatprep.subr.bf16.mxu0 %v599
    %771 = vmatpush1.bf16.msra.mxu0 %v598
    %772 = vmatprep.subr.bf16.mxu0 %v603
    %773 = vmatpush1.bf16.msra.mxu0 %v602
    %774 = vmatprep.subr.bf16.mxu0 %v607
    %775 = vmatpush1.bf16.msra.mxu0 %v606
    %776 = vmatprep.subr.bf16.mxu0 %v611
    %777 = vmatpush1.bf16.msra.mxu0 %v610
    %778 = vmatprep.subr.bf16.mxu0 %v615
    %779 = vmatpush1.bf16.msra.mxu0 %v614
    %780 = vmatprep.subr.bf16.mxu0 %v619
    %781 = vmatpush1.bf16.msra.mxu0 %v618
    %782 = vmatprep.mubr.bf16.mxu0 %v265
    %783 = vmatmul.mubr.bf16.gmra.mrb[0].mxu0 %v264
    %v784 = vpop.f32.mrb[0].mxu0
    %v785 = vadd.f32 %v242, %v784
    %v786 = vpop.f32.mrb[0].mxu0
    %v787 = vadd.f32 %v246, %v786
    %v788 = vpop.f32.mrb[0].mxu0
    %v789 = vpop.f32.mrb[0].mxu0
    %790 = vdwg.mxu0
    %791 = vmatprep.subr.bf16.mxu0 %v623
    %792 = vmatpush1.bf16.msra.mxu0 %v622
    %793 = vmatprep.subr.bf16.mxu0 %v627
    %794 = vmatpush1.bf16.msra.mxu0 %v626
    %795 = vmatprep.subr.bf16.mxu0 %v631
    %796 = vmatpush1.bf16.msra.mxu0 %v630
    %797 = vmatprep.subr.bf16.mxu0 %v635
    %798 = vmatpush1.bf16.msra.mxu0 %v634
    %799 = vmatprep.subr.bf16.mxu0 %v639
    %800 = vmatpush1.bf16.msra.mxu0 %v638
    %801 = vmatprep.subr.bf16.mxu0 %v643
    %802 = vmatpush1.bf16.msra.mxu0 %v642
    %803 = vmatprep.subr.bf16.mxu0 %v647
    %804 = vmatpush1.bf16.msra.mxu0 %v646
    %805 = vmatprep.subr.bf16.mxu0 %v651
    %806 = vmatpush1.bf16.msra.mxu0 %v650
    %807 = vmatprep.subr.bf16.mxu0 0
    %808 = vmatpush1.bf16.msra.mxu0 0
    %809 = vmatprep.subr.bf16.mxu0 0
    %810 = vmatpush1.bf16.msra.mxu0 0
    %811 = vmatprep.subr.bf16.mxu0 0
    %812 = vmatpush1.bf16.msra.mxu0 0
    %813 = vmatprep.subr.bf16.mxu0 0
    %814 = vmatpush1.bf16.msra.mxu0 0
    %815 = vmatprep.subr.bf16.mxu0 0
    %816 = vmatpush1.bf16.msra.mxu0 0
    %817 = vmatprep.subr.bf16.mxu0 0
    %818 = vmatpush1.bf16.msra.mxu0 0
    %819 = vmatprep.subr.bf16.mxu0 0
    %820 = vmatpush1.bf16.msra.mxu0 0
    %821 = vmatprep.subr.bf16.mxu0 0
    %822 = vmatpush1.bf16.msra.mxu0 0
    %823 = vmatprep.mubr.bf16.mxu0 0
    %824 = vmatmul.mubr.bf16.gmra.mrb[0].mxu0 %v266
    %v825 = vpop.f32.mrb[0].mxu0
    %v826 = vadd.f32 %v785, %v825
    %v827 = vpop.f32.mrb[0].mxu0
    %v828 = vadd.f32 %v787, %v827
    %v829 = vpop.f32.mrb[0].mxu0
    %v830 = vpop.f32.mrb[0].mxu0
    %831 = vdwg.mxu0
    %832 = vmatprep.subr.bf16.mxu0 %v561
    %833 = vmatpush1.bf16.msra.mxu0 %v560
    %834 = vmatprep.subr.bf16.mxu0 %v565
    %835 = vmatpush1.bf16.msra.mxu0 %v564
    %836 = vmatprep.subr.bf16.mxu0 %v569
    %837 = vmatpush1.bf16.msra.mxu0 %v568
    %838 = vmatprep.subr.bf16.mxu0 %v573
    %839 = vmatpush1.bf16.msra.mxu0 %v572
    %840 = vmatprep.subr.bf16.mxu0 %v577
    %841 = vmatpush1.bf16.msra.mxu0 %v576
    %842 = vmatprep.subr.bf16.mxu0 %v581
    %843 = vmatpush1.bf16.msra.mxu0 %v580
    %844 = vmatprep.subr.bf16.mxu0 %v585
    %845 = vmatpush1.bf16.msra.mxu0 %v584
    %846 = vmatprep.subr.bf16.mxu0 %v589
    %847 = vmatpush1.bf16.msra.mxu0 %v588
    %848 = vmatprep.subr.bf16.mxu0 %v593
    %849 = vmatpush1.bf16.msra.mxu0 %v592
    %850 = vmatprep.subr.bf16.mxu0 %v597
    %851 = vmatpush1.bf16.msra.mxu0 %v596
    %852 = vmatprep.subr.bf16.mxu0 %v601
    %853 = vmatpush1.bf16.msra.mxu0 %v600
    %854 = vmatprep.subr.bf16.mxu0 %v605
    %855 = vmatpush1.bf16.msra.mxu0 %v604
    %856 = vmatprep.subr.bf16.mxu0 %v609
    %857 = vmatpush1.bf16.msra.mxu0 %v608
    %858 = vmatprep.subr.bf16.mxu0 %v613
    %859 = vmatpush1.bf16.msra.mxu0 %v612
    %860 = vmatprep.subr.bf16.mxu0 %v617
    %861 = vmatpush1.bf16.msra.mxu0 %v616
    %862 = vmatprep.subr.bf16.mxu0 %v621
    %863 = vmatpush1.bf16.msra.mxu0 %v620
    %864 = vmatprep.mubr.bf16.mxu0 %v265
    %865 = vmatmul.mubr.bf16.gmra.mrb[0].mxu0 %v264
    %v866 = vpop.f32.mrb[0].mxu0
    %v867 = vadd.f32 %v250, %v866
    %v868 = vpop.f32.mrb[0].mxu0
    %v869 = vadd.f32 %v254, %v868
    %v870 = vpop.f32.mrb[0].mxu0
    %v871 = vpop.f32.mrb[0].mxu0
    %872 = vdwg.mxu0
    %873 = vmatprep.subr.bf16.mxu0 %v625
    %874 = vmatpush1.bf16.msra.mxu0 %v624
    %875 = vmatprep.subr.bf16.mxu0 %v629
    %876 = vmatpush1.bf16.msra.mxu0 %v628
    %877 = vmatprep.subr.bf16.mxu0 %v633
    %878 = vmatpush1.bf16.msra.mxu0 %v632
    %879 = vmatprep.subr.bf16.mxu0 %v637
    %880 = vmatpush1.bf16.msra.mxu0 %v636
    %881 = vmatprep.subr.bf16.mxu0 %v641
    %882 = vmatpush1.bf16.msra.mxu0 %v640
    %883 = vmatprep.subr.bf16.mxu0 %v645
    %884 = vmatpush1.bf16.msra.mxu0 %v644
    %885 = vmatprep.subr.bf16.mxu0 %v649
    %886 = vmatpush1.bf16.msra.mxu0 %v648
    %887 = vmatprep.subr.bf16.mxu0 %v653
    %888 = vmatpush1.bf16.msra.mxu0 %v652
    %889 = vmatprep.subr.bf16.mxu0 0
    %890 = vmatpush1.bf16.msra.mxu0 0
    %891 = vmatprep.subr.bf16.mxu0 0
    %892 = vmatpush1.bf16.msra.mxu0 0
    %893 = vmatprep.subr.bf16.mxu0 0
    %894 = vmatpush1.bf16.msra.mxu0 0
    %895 = vmatprep.subr.bf16.mxu0 0
    %896 = vmatpush1.bf16.msra.mxu0 0
    %897 = vmatprep.subr.bf16.mxu0 0
    %898 = vmatpush1.bf16.msra.mxu0 0
    %899 = vmatprep.subr.bf16.mxu0 0
    %900 = vmatpush1.bf16.msra.mxu0 0
    %901 = vmatprep.subr.bf16.mxu0 0
    %902 = vmatpush1.bf16.msra.mxu0 0
    %903 = vmatprep.subr.bf16.mxu0 0
    %904 = vmatpush1.bf16.msra.mxu0 0
    %905 = vmatprep.mubr.bf16.mxu0 0
    %906 = vmatmul.mubr.bf16.gmra.mrb[0].mxu0 %v266
    %v907 = vpop.f32.mrb[0].mxu0
    %v908 = vadd.f32 %v867, %v907
    %v909 = vpop.f32.mrb[0].mxu0
    %v910 = vadd.f32 %v869, %v909
    %v911 = vpop.f32.mrb[0].mxu0
    %v912 = vpop.f32.mrb[0].mxu0
    %913 = vdwg.mxu0
    %v914 = vmax.f32 %v826, 0.0
    %v915 = vmax.f32 %v828, 0.0
    %v916 = vmax.f32 %v908, 0.0
    %v917 = vmax.f32 %v910, 0.0
    %v918 = vpack.c.bf16 %v914, %v914
    %v919 = vpack.c.bf16 %v915, %v915
    %v920 = vpack.c.bf16 %v916, %v916
    %v921 = vpack.c.bf16 %v917, %v917
    %v922 = vld [vmem:[#allocation7] sm:$0xff]
    %v923 = vld [vmem:[#allocation7 + $0x8] sm:$0xff]
    %v924 = vld [vmem:[#allocation7 + $0x10] sm:$0xff]
    %v925 = vld [vmem:[#allocation7 + $0x18] sm:$0xff]
    %v926 = vld [vmem:[#allocation7 + $0x20] sm:$0xff]
    %v927 = vld [vmem:[#allocation7 + $0x28] sm:$0xff]
    %v928 = vld [vmem:[#allocation7 + $0x30] sm:$0xff]
    %v929 = vld [vmem:[#allocation7 + $0x38] sm:$0xff]
    %v930 = vld [vmem:[#allocation7 + $0x40] sm:$0xff]
    %v931 = vld [vmem:[#allocation7 + $0x48] sm:$0xff]
    %v932 = vld [vmem:[#allocation7 + $0x50] sm:$0xff]
    %v933 = vld [vmem:[#allocation7 + $0x58] sm:$0xff]
    %v934 = vld [vmem:[#allocation7 + $0x60] sm:$0xff]
    %v935 = vld [vmem:[#allocation7 + $0x68] sm:$0xff]
    %v936 = vld [vmem:[#allocation7 + $0x70] sm:$0xff]
    %v937 = vld [vmem:[#allocation7 + $0x78] sm:$0xff]
    %v938 = vld [vmem:[#allocation7 + $0x80] sm:$0xff]
    %v939 = vld [vmem:[#allocation7 + $0x88] sm:$0xff]
    %v940 = vld [vmem:[#allocation7 + $0x90] sm:$0xff]
    %v941 = vld [vmem:[#allocation7 + $0x98] sm:$0xff]
    %v942 = vld [vmem:[#allocation7 + $0xa0] sm:$0xff]
    %v943 = vld [vmem:[#allocation7 + $0xa8] sm:$0xff]
    %v944 = vld [vmem:[#allocation7 + $0xb0] sm:$0xff]
    %v945 = vld [vmem:[#allocation7 + $0xb8] sm:$0xff]
    %v946 = vld [vmem:[#allocation7 + $0xc0] sm:$0xff]
    %v947 = vld [vmem:[#allocation7 + $0xc8] sm:$0xff]
    %v948 = vld [vmem:[#allocation7 + $0xd0] sm:$0xff]
    %v949 = vld [vmem:[#allocation7 + $0xd8] sm:$0xff]
    %v950 = vld [vmem:[#allocation7 + $0xe0] sm:$0xff]
    %v951 = vld [vmem:[#allocation7 + $0xe8] sm:$0xff]
    %v952 = vld [vmem:[#allocation7 + $0xf0] sm:$0xff]
    %v953 = vld [vmem:[#allocation7 + $0xf8] sm:$0xff]
    %v954 = vld [vmem:[#allocation7 + $0x100] sm:$0xff]
    %v955 = vld [vmem:[#allocation7 + $0x108] sm:$0xff]
    %v956 = vld [vmem:[#allocation7 + $0x110] sm:$0xff]
    %v957 = vld [vmem:[#allocation7 + $0x118] sm:$0xff]
    %v958 = vld [vmem:[#allocation7 + $0x120] sm:$0xff]
    %v959 = vld [vmem:[#allocation7 + $0x128] sm:$0xff]
    %v960 = vld [vmem:[#allocation7 + $0x130] sm:$0xff]
    %v961 = vld [vmem:[#allocation7 + $0x138] sm:$0xff]
    %v962 = vld [vmem:[#allocation7 + $0x140] sm:$0xff]
    %v963 = vld [vmem:[#allocation7 + $0x148] sm:$0xff]
    %v964 = vld [vmem:[#allocation7 + $0x150] sm:$0xff]
    %v965 = vld [vmem:[#allocation7 + $0x158] sm:$0xff]
    %v966 = vld [vmem:[#allocation7 + $0x160] sm:$0xff]
    %v967 = vld [vmem:[#allocation7 + $0x168] sm:$0xff]
    %v968 = vld [vmem:[#allocation7 + $0x170] sm:$0xff]
    %v969 = vld [vmem:[#allocation7 + $0x178] sm:$0xff]
    %v970 = vld [vmem:[#allocation7 + $0x180] sm:$0xff]
    %v971 = vld [vmem:[#allocation7 + $0x188] sm:$0xff]
    %v972 = vld [vmem:[#allocation7 + $0x190] sm:$0xff]
    %v973 = vld [vmem:[#allocation7 + $0x198] sm:$0xff]
    %v974 = vld [vmem:[#allocation7 + $0x1a0] sm:$0xff]
    %v975 = vld [vmem:[#allocation7 + $0x1a8] sm:$0xff]
    %v976 = vld [vmem:[#allocation7 + $0x1b0] sm:$0xff]
    %v977 = vld [vmem:[#allocation7 + $0x1b8] sm:$0xff]
    %v978 = vld [vmem:[#allocation7 + $0x1c0] sm:$0xff]
    %v979 = vld [vmem:[#allocation7 + $0x1c8] sm:$0xff]
    %v980 = vld [vmem:[#allocation7 + $0x1d0] sm:$0xff]
    %v981 = vld [vmem:[#allocation7 + $0x1d8] sm:$0xff]
    %v982 = vld [vmem:[#allocation7 + $0x1e0] sm:$0xff]
    %v983 = vld [vmem:[#allocation7 + $0x1e8] sm:$0xff]
    %v984 = vld [vmem:[#allocation7 + $0x1f0] sm:$0xff]
    %v985 = vld [vmem:[#allocation7 + $0x1f8] sm:$0xff]
    %v986 = vld [vmem:[%s4] sm:$0x3]
    %v988 = vlaneseq
    %v989 = vshrl.u32 %v988, 7
    %v990 = vsub.s32 0, %v989
    %v991 = vrot.slane %v986, %v990
    %v992 = vlaneseq
    %v993 = vshrl.u32 %v992, 7
    %v994 = vsub.s32 1, %v993
    %v995 = vrot.slane %v986, %v994
    %v1062 = vunpack.c.l.b16 %v922
    %v1063 = vunpack.c.h.b16 %v922
    %v1064 = vunpack.c.l.b16 %v923
    %v1065 = vunpack.c.h.b16 %v923
    %v1066 = vunpack.c.l.b16 %v924
    %v1067 = vunpack.c.h.b16 %v924
    %v1068 = vunpack.c.l.b16 %v925
    %v1069 = vunpack.c.h.b16 %v925
    %v1070 = vunpack.c.l.b16 %v926
    %v1071 = vunpack.c.h.b16 %v926
    %v1072 = vunpack.c.l.b16 %v927
    %v1073 = vunpack.c.h.b16 %v927
    %v1074 = vunpack.c.l.b16 %v928
    %v1075 = vunpack.c.h.b16 %v928
    %v1076 = vunpack.c.l.b16 %v929
    %v1077 = vunpack.c.h.b16 %v929
    %v1078 = vunpack.c.l.b16 %v930
    %v1079 = vunpack.c.h.b16 %v930
    %v1080 = vunpack.c.l.b16 %v931
    %v1081 = vunpack.c.h.b16 %v931
    %v1082 = vunpack.c.l.b16 %v932
    %v1083 = vunpack.c.h.b16 %v932
    %v1084 = vunpack.c.l.b16 %v933
    %v1085 = vunpack.c.h.b16 %v933
    %v1086 = vunpack.c.l.b16 %v934
    %v1087 = vunpack.c.h.b16 %v934
    %v1088 = vunpack.c.l.b16 %v935
    %v1089 = vunpack.c.h.b16 %v935
    %v1090 = vunpack.c.l.b16 %v936
    %v1091 = vunpack.c.h.b16 %v936
    %v1092 = vunpack.c.l.b16 %v937
    %v1093 = vunpack.c.h.b16 %v937
    %v1094 = vunpack.c.l.b16 %v938
    %v1095 = vunpack.c.h.b16 %v938
    %v1096 = vunpack.c.l.b16 %v939
    %v1097 = vunpack.c.h.b16 %v939
    %v1098 = vunpack.c.l.b16 %v940
    %v1099 = vunpack.c.h.b16 %v940
    %v1100 = vunpack.c.l.b16 %v941
    %v1101 = vunpack.c.h.b16 %v941
    %v1102 = vunpack.c.l.b16 %v942
    %v1103 = vunpack.c.h.b16 %v942
    %v1104 = vunpack.c.l.b16 %v943
    %v1105 = vunpack.c.h.b16 %v943
    %v1106 = vunpack.c.l.b16 %v944
    %v1107 = vunpack.c.h.b16 %v944
    %v1108 = vunpack.c.l.b16 %v945
    %v1109 = vunpack.c.h.b16 %v945
    %v1110 = vunpack.c.l.b16 %v946
    %v1111 = vunpack.c.h.b16 %v946
    %v1112 = vunpack.c.l.b16 %v947
    %v1113 = vunpack.c.h.b16 %v947
    %v1114 = vunpack.c.l.b16 %v948
    %v1115 = vunpack.c.h.b16 %v948
    %v1116 = vunpack.c.l.b16 %v949
    %v1117 = vunpack.c.h.b16 %v949
    %v1118 = vunpack.c.l.b16 %v950
    %v1119 = vunpack.c.h.b16 %v950
    %v1120 = vunpack.c.l.b16 %v951
    %v1121 = vunpack.c.h.b16 %v951
    %v1122 = vunpack.c.l.b16 %v952
    %v1123 = vunpack.c.h.b16 %v952
    %v1124 = vunpack.c.l.b16 %v953
    %v1125 = vunpack.c.h.b16 %v953
    %v1126 = vunpack.c.l.b16 %v954
    %v1127 = vunpack.c.h.b16 %v954
    %v1128 = vunpack.c.l.b16 %v955
    %v1129 = vunpack.c.h.b16 %v955
    %v1130 = vunpack.c.l.b16 %v956
    %v1131 = vunpack.c.h.b16 %v956
    %v1132 = vunpack.c.l.b16 %v957
    %v1133 = vunpack.c.h.b16 %v957
    %v1134 = vunpack.c.l.b16 %v958
    %v1135 = vunpack.c.h.b16 %v958
    %v1136 = vunpack.c.l.b16 %v959
    %v1137 = vunpack.c.h.b16 %v959
    %v1138 = vunpack.c.l.b16 %v960
    %v1139 = vunpack.c.h.b16 %v960
    %v1140 = vunpack.c.l.b16 %v961
    %v1141 = vunpack.c.h.b16 %v961
    %v1142 = vunpack.c.l.b16 %v962
    %v1143 = vunpack.c.h.b16 %v962
    %v1144 = vunpack.c.l.b16 %v963
    %v1145 = vunpack.c.h.b16 %v963
    %v1146 = vunpack.c.l.b16 %v964
    %v1147 = vunpack.c.h.b16 %v964
    %v1148 = vunpack.c.l.b16 %v965
    %v1149 = vunpack.c.h.b16 %v965
    %v1150 = vunpack.c.l.b16 %v966
    %v1151 = vunpack.c.h.b16 %v966
    %v1152 = vunpack.c.l.b16 %v967
    %v1153 = vunpack.c.h.b16 %v967
    %v1154 = vunpack.c.l.b16 %v968
    %v1155 = vunpack.c.h.b16 %v968
    %v1156 = vunpack.c.l.b16 %v969
    %v1157 = vunpack.c.h.b16 %v969
    %v1158 = vunpack.c.l.b16 %v970
    %v1159 = vunpack.c.h.b16 %v970
    %v1160 = vunpack.c.l.b16 %v971
    %v1161 = vunpack.c.h.b16 %v971
    %v1162 = vunpack.c.l.b16 %v972
    %v1163 = vunpack.c.h.b16 %v972
    %v1164 = vunpack.c.l.b16 %v973
    %v1165 = vunpack.c.h.b16 %v973
    %v1166 = vunpack.c.l.b16 %v974
    %v1167 = vunpack.c.h.b16 %v974
    %v1168 = vunpack.c.l.b16 %v975
    %v1169 = vunpack.c.h.b16 %v975
    %v1170 = vunpack.c.l.b16 %v976
    %v1171 = vunpack.c.h.b16 %v976
    %v1172 = vunpack.c.l.b16 %v977
    %v1173 = vunpack.c.h.b16 %v977
    %v1174 = vunpack.c.l.b16 %v978
    %v1175 = vunpack.c.h.b16 %v978
    %v1176 = vunpack.c.l.b16 %v979
    %v1177 = vunpack.c.h.b16 %v979
    %v1178 = vunpack.c.l.b16 %v980
    %v1179 = vunpack.c.h.b16 %v980
    %v1180 = vunpack.c.l.b16 %v981
    %v1181 = vunpack.c.h.b16 %v981
    %v1182 = vunpack.c.l.b16 %v982
    %v1183 = vunpack.c.h.b16 %v982
    %v1184 = vunpack.c.l.b16 %v983
    %v1185 = vunpack.c.h.b16 %v983
    %v1186 = vunpack.c.l.b16 %v984
    %v1187 = vunpack.c.h.b16 %v984
    %v1188 = vunpack.c.l.b16 %v985
    %v1189 = vunpack.c.h.b16 %v985
    %v1190 = vpack.c.b16 %v1064, %v1062
    %v1191 = vpack.c.b16 %v1065, %v1063
    %v1192 = vpack.c.b16 %v1068, %v1066
    %v1193 = vpack.c.b16 %v1069, %v1067
    %v1194 = vpack.c.b16 %v1072, %v1070
    %v1195 = vpack.c.b16 %v1073, %v1071
    %v1196 = vpack.c.b16 %v1076, %v1074
    %v1197 = vpack.c.b16 %v1077, %v1075
    %v1198 = vpack.c.b16 %v1080, %v1078
    %v1199 = vpack.c.b16 %v1081, %v1079
    %v1200 = vpack.c.b16 %v1084, %v1082
    %v1201 = vpack.c.b16 %v1085, %v1083
    %v1202 = vpack.c.b16 %v1088, %v1086
    %v1203 = vpack.c.b16 %v1089, %v1087
    %v1204 = vpack.c.b16 %v1092, %v1090
    %v1205 = vpack.c.b16 %v1093, %v1091
    %v1206 = vpack.c.b16 %v1096, %v1094
    %v1207 = vpack.c.b16 %v1097, %v1095
    %v1208 = vpack.c.b16 %v1100, %v1098
    %v1209 = vpack.c.b16 %v1101, %v1099
    %v1210 = vpack.c.b16 %v1104, %v1102
    %v1211 = vpack.c.b16 %v1105, %v1103
    %v1212 = vpack.c.b16 %v1108, %v1106
    %v1213 = vpack.c.b16 %v1109, %v1107
    %v1214 = vpack.c.b16 %v1112, %v1110
    %v1215 = vpack.c.b16 %v1113, %v1111
    %v1216 = vpack.c.b16 %v1116, %v1114
    %v1217 = vpack.c.b16 %v1117, %v1115
    %v1218 = vpack.c.b16 %v1120, %v1118
    %v1219 = vpack.c.b16 %v1121, %v1119
    %v1220 = vpack.c.b16 %v1124, %v1122
    %v1221 = vpack.c.b16 %v1125, %v1123
    %v1222 = vpack.c.b16 %v1128, %v1126
    %v1223 = vpack.c.b16 %v1129, %v1127
    %v1224 = vpack.c.b16 %v1132, %v1130
    %v1225 = vpack.c.b16 %v1133, %v1131
    %v1226 = vpack.c.b16 %v1136, %v1134
    %v1227 = vpack.c.b16 %v1137, %v1135
    %v1228 = vpack.c.b16 %v1140, %v1138
    %v1229 = vpack.c.b16 %v1141, %v1139
    %v1230 = vpack.c.b16 %v1144, %v1142
    %v1231 = vpack.c.b16 %v1145, %v1143
    %v1232 = vpack.c.b16 %v1148, %v1146
    %v1233 = vpack.c.b16 %v1149, %v1147
    %v1234 = vpack.c.b16 %v1152, %v1150
    %v1235 = vpack.c.b16 %v1153, %v1151
    %v1236 = vpack.c.b16 %v1156, %v1154
    %v1237 = vpack.c.b16 %v1157, %v1155
    %v1238 = vpack.c.b16 %v1160, %v1158
    %v1239 = vpack.c.b16 %v1161, %v1159
    %v1240 = vpack.c.b16 %v1164, %v1162
    %v1241 = vpack.c.b16 %v1165, %v1163
    %v1242 = vpack.c.b16 %v1168, %v1166
    %v1243 = vpack.c.b16 %v1169, %v1167
    %v1244 = vpack.c.b16 %v1172, %v1170
    %v1245 = vpack.c.b16 %v1173, %v1171
    %v1246 = vpack.c.b16 %v1176, %v1174
    %v1247 = vpack.c.b16 %v1177, %v1175
    %v1248 = vpack.c.b16 %v1180, %v1178
    %v1249 = vpack.c.b16 %v1181, %v1179
    %v1250 = vpack.c.b16 %v1184, %v1182
    %v1251 = vpack.c.b16 %v1185, %v1183
    %v1252 = vpack.c.b16 %v1188, %v1186
    %v1253 = vpack.c.b16 %v1189, %v1187
    %1318 = vmatprep.subr.bf16.mxu0 %v1191
    %1319 = vmatpush1.bf16.msra.mxu0 %v1190
    %1320 = vmatprep.subr.bf16.mxu0 %v1193
    %1321 = vmatpush1.bf16.msra.mxu0 %v1192
    %1322 = vmatprep.subr.bf16.mxu0 %v1195
    %1323 = vmatpush1.bf16.msra.mxu0 %v1194
    %1324 = vmatprep.subr.bf16.mxu0 %v1197
    %1325 = vmatpush1.bf16.msra.mxu0 %v1196
    %1326 = vmatprep.subr.bf16.mxu0 %v1199
    %1327 = vmatpush1.bf16.msra.mxu0 %v1198
    %1328 = vmatprep.subr.bf16.mxu0 %v1201
    %1329 = vmatpush1.bf16.msra.mxu0 %v1200
    %1330 = vmatprep.subr.bf16.mxu0 %v1203
    %1331 = vmatpush1.bf16.msra.mxu0 %v1202
    %1332 = vmatprep.subr.bf16.mxu0 %v1205
    %1333 = vmatpush1.bf16.msra.mxu0 %v1204
    %1334 = vmatprep.subr.bf16.mxu0 %v1207
    %1335 = vmatpush1.bf16.msra.mxu0 %v1206
    %1336 = vmatprep.subr.bf16.mxu0 %v1209
    %1337 = vmatpush1.bf16.msra.mxu0 %v1208
    %1338 = vmatprep.subr.bf16.mxu0 %v1211
    %1339 = vmatpush1.bf16.msra.mxu0 %v1210
    %1340 = vmatprep.subr.bf16.mxu0 %v1213
    %1341 = vmatpush1.bf16.msra.mxu0 %v1212
    %1342 = vmatprep.subr.bf16.mxu0 %v1215
    %1343 = vmatpush1.bf16.msra.mxu0 %v1214
    %1344 = vmatprep.subr.bf16.mxu0 %v1217
    %1345 = vmatpush1.bf16.msra.mxu0 %v1216
    %1346 = vmatprep.subr.bf16.mxu0 %v1219
    %1347 = vmatpush1.bf16.msra.mxu0 %v1218
    %1348 = vmatprep.subr.bf16.mxu0 %v1221
    %1349 = vmatpush1.bf16.msra.mxu0 %v1220
    %1350 = vmatprep.mubr.bf16.mxu0 %v919
    %1351 = vmatmul.mubr.bf16.gmra.mrb[0].mxu0 %v918
    %v1352 = vpop.f32.mrb[0].mxu0
    %v1353 = vadd.f32 %v991, %v1352
    %v1354 = vpop.f32.mrb[0].mxu0
    %v1355 = vadd.f32 %v995, %v1354
    %v1356 = vpop.f32.mrb[0].mxu0
    %v1357 = vpop.f32.mrb[0].mxu0
    %1358 = vdwg.mxu0
    %1359 = vmatprep.subr.bf16.mxu0 %v1223
    %1360 = vmatpush1.bf16.msra.mxu0 %v1222
    %1361 = vmatprep.subr.bf16.mxu0 %v1225
    %1362 = vmatpush1.bf16.msra.mxu0 %v1224
    %1363 = vmatprep.subr.bf16.mxu0 %v1227
    %1364 = vmatpush1.bf16.msra.mxu0 %v1226
    %1365 = vmatprep.subr.bf16.mxu0 %v1229
    %1366 = vmatpush1.bf16.msra.mxu0 %v1228
    %1367 = vmatprep.subr.bf16.mxu0 %v1231
    %1368 = vmatpush1.bf16.msra.mxu0 %v1230
    %1369 = vmatprep.subr.bf16.mxu0 %v1233
    %1370 = vmatpush1.bf16.msra.mxu0 %v1232
    %1371 = vmatprep.subr.bf16.mxu0 %v1235
    %1372 = vmatpush1.bf16.msra.mxu0 %v1234
    %1373 = vmatprep.subr.bf16.mxu0 %v1237
    %1374 = vmatpush1.bf16.msra.mxu0 %v1236
    %1375 = vmatprep.subr.bf16.mxu0 %v1239
    %1376 = vmatpush1.bf16.msra.mxu0 %v1238
    %1377 = vmatprep.subr.bf16.mxu0 %v1241
    %1378 = vmatpush1.bf16.msra.mxu0 %v1240
    %1379 = vmatprep.subr.bf16.mxu0 %v1243
    %1380 = vmatpush1.bf16.msra.mxu0 %v1242
    %1381 = vmatprep.subr.bf16.mxu0 %v1245
    %1382 = vmatpush1.bf16.msra.mxu0 %v1244
    %1383 = vmatprep.subr.bf16.mxu0 %v1247
    %1384 = vmatpush1.bf16.msra.mxu0 %v1246
    %1385 = vmatprep.subr.bf16.mxu0 %v1249
    %1386 = vmatpush1.bf16.msra.mxu0 %v1248
    %1387 = vmatprep.subr.bf16.mxu0 %v1251
    %1388 = vmatpush1.bf16.msra.mxu0 %v1250
    %1389 = vmatprep.subr.bf16.mxu0 %v1253
    %1390 = vmatpush1.bf16.msra.mxu0 %v1252
    %1391 = vmatprep.mubr.bf16.mxu0 %v921
    %1392 = vmatmul.mubr.bf16.gmra.mrb[0].mxu0 %v920
    %v1393 = vpop.f32.mrb[0].mxu0
    %v1394 = vadd.f32 %v1353, %v1393
    %v1395 = vpop.f32.mrb[0].mxu0
    %v1396 = vadd.f32 %v1355, %v1395
    %v1397 = vpop.f32.mrb[0].mxu0
    %v1398 = vpop.f32.mrb[0].mxu0
    %1399 = vdwg.mxu0
    %v1400 = vmax.f32 %v1394, 0.0
    %v1401 = vmax.f32 %v1396, 0.0
    %v1402 = vpack.c.bf16 %v1400, %v1400
    %v1403 = vpack.c.bf16 %v1401, %v1401
    %v1404 = vld [vmem:[#allocation8] sm:$0xf]
    %v1405 = vld [vmem:[#allocation8 + $0x4] sm:$0xf]
    %v1406 = vld [vmem:[#allocation8 + $0x8] sm:$0xf]
    %v1407 = vld [vmem:[#allocation8 + $0xc] sm:$0xf]
    %v1408 = vld [vmem:[#allocation8 + $0x10] sm:$0xf]
    %v1409 = vld [vmem:[#allocation8 + $0x14] sm:$0xf]
    %v1410 = vld [vmem:[#allocation8 + $0x18] sm:$0xf]
    %v1411 = vld [vmem:[#allocation8 + $0x1c] sm:$0xf]
    %v1412 = vld [vmem:[#allocation8 + $0x20] sm:$0xf]
    %v1413 = vld [vmem:[#allocation8 + $0x24] sm:$0xf]
    %v1414 = vld [vmem:[#allocation8 + $0x28] sm:$0xf]
    %v1415 = vld [vmem:[#allocation8 + $0x2c] sm:$0xf]
    %v1416 = vld [vmem:[#allocation8 + $0x30] sm:$0xf]
    %v1417 = vld [vmem:[#allocation8 + $0x34] sm:$0xf]
    %v1418 = vld [vmem:[#allocation8 + $0x38] sm:$0xf]
    %v1419 = vld [vmem:[#allocation8 + $0x3c] sm:$0xf]
    %v1420 = vld [vmem:[#allocation8 + $0x40] sm:$0xf]
    %v1421 = vld [vmem:[#allocation8 + $0x44] sm:$0xf]
    %v1422 = vld [vmem:[#allocation8 + $0x48] sm:$0xf]
    %v1423 = vld [vmem:[#allocation8 + $0x4c] sm:$0xf]
    %v1424 = vld [vmem:[#allocation8 + $0x50] sm:$0xf]
    %v1425 = vld [vmem:[#allocation8 + $0x54] sm:$0xf]
    %v1426 = vld [vmem:[#allocation8 + $0x58] sm:$0xf]
    %v1427 = vld [vmem:[#allocation8 + $0x5c] sm:$0xf]
    %v1428 = vld [vmem:[#allocation8 + $0x60] sm:$0xf]
    %v1429 = vld [vmem:[#allocation8 + $0x64] sm:$0xf]
    %v1430 = vld [vmem:[#allocation8 + $0x68] sm:$0xf]
    %v1431 = vld [vmem:[#allocation8 + $0x6c] sm:$0xf]
    %v1432 = vld [vmem:[#allocation8 + $0x70] sm:$0xf]
    %v1433 = vld [vmem:[#allocation8 + $0x74] sm:$0xf]
    %v1434 = vld [vmem:[#allocation8 + $0x78] sm:$0xf]
    %v1435 = vld [vmem:[#allocation8 + $0x7c] sm:$0xf]
    %v1436 = vld [vmem:[%s6] sm:$0x1]
    %v1438 = vlaneseq
    %v1439 = vshrl.u32 %v1438, 7
    %v1440 = vsub.s32 0, %v1439
    %v1441 = vrot.slane %v1436, %v1440
    %v1475 = vunpack.c.l.b16 %v1404
    %v1476 = vunpack.c.l.b16 %v1405
    %v1477 = vunpack.c.l.b16 %v1406
    %v1478 = vunpack.c.l.b16 %v1407
    %v1479 = vunpack.c.l.b16 %v1408
    %v1480 = vunpack.c.l.b16 %v1409
    %v1481 = vunpack.c.l.b16 %v1410
    %v1482 = vunpack.c.l.b16 %v1411
    %v1483 = vunpack.c.l.b16 %v1412
    %v1484 = vunpack.c.l.b16 %v1413
    %v1485 = vunpack.c.l.b16 %v1414
    %v1486 = vunpack.c.l.b16 %v1415
    %v1487 = vunpack.c.l.b16 %v1416
    %v1488 = vunpack.c.l.b16 %v1417
    %v1489 = vunpack.c.l.b16 %v1418
    %v1490 = vunpack.c.l.b16 %v1419
    %v1491 = vunpack.c.l.b16 %v1420
    %v1492 = vunpack.c.l.b16 %v1421
    %v1493 = vunpack.c.l.b16 %v1422
    %v1494 = vunpack.c.l.b16 %v1423
    %v1495 = vunpack.c.l.b16 %v1424
    %v1496 = vunpack.c.l.b16 %v1425
    %v1497 = vunpack.c.l.b16 %v1426
    %v1498 = vunpack.c.l.b16 %v1427
    %v1499 = vunpack.c.l.b16 %v1428
    %v1500 = vunpack.c.l.b16 %v1429
    %v1501 = vunpack.c.l.b16 %v1430
    %v1502 = vunpack.c.l.b16 %v1431
    %v1503 = vunpack.c.l.b16 %v1432
    %v1504 = vunpack.c.l.b16 %v1433
    %v1505 = vunpack.c.l.b16 %v1434
    %v1506 = vunpack.c.l.b16 %v1435
    %v1507 = vpack.c.b16 %v1476, %v1475
    %v1508 = vpack.c.b16 %v1478, %v1477
    %v1509 = vpack.c.b16 %v1480, %v1479
    %v1510 = vpack.c.b16 %v1482, %v1481
    %v1511 = vpack.c.b16 %v1484, %v1483
    %v1512 = vpack.c.b16 %v1486, %v1485
    %v1513 = vpack.c.b16 %v1488, %v1487
    %v1514 = vpack.c.b16 %v1490, %v1489
    %v1515 = vpack.c.b16 %v1492, %v1491
    %v1516 = vpack.c.b16 %v1494, %v1493
    %v1517 = vpack.c.b16 %v1496, %v1495
    %v1518 = vpack.c.b16 %v1498, %v1497
    %v1519 = vpack.c.b16 %v1500, %v1499
    %v1520 = vpack.c.b16 %v1502, %v1501
    %v1521 = vpack.c.b16 %v1504, %v1503
    %v1522 = vpack.c.b16 %v1506, %v1505
    %1539 = vmatprep.subr.bf16.mxu0 0
    %1540 = vmatpush1.bf16.msra.mxu0 %v1507
    %1541 = vmatprep.subr.bf16.mxu0 0
    %1542 = vmatpush1.bf16.msra.mxu0 %v1508
    %1543 = vmatprep.subr.bf16.mxu0 0
    %1544 = vmatpush1.bf16.msra.mxu0 %v1509
    %1545 = vmatprep.subr.bf16.mxu0 0
    %1546 = vmatpush1.bf16.msra.mxu0 %v1510
    %1547 = vmatprep.subr.bf16.mxu0 0
    %1548 = vmatpush1.bf16.msra.mxu0 %v1511
    %1549 = vmatprep.subr.bf16.mxu0 0
    %1550 = vmatpush1.bf16.msra.mxu0 %v1512
    %1551 = vmatprep.subr.bf16.mxu0 0
    %1552 = vmatpush1.bf16.msra.mxu0 %v1513
    %1553 = vmatprep.subr.bf16.mxu0 0
    %1554 = vmatpush1.bf16.msra.mxu0 %v1514
    %1555 = vmatprep.subr.bf16.mxu0 0
    %1556 = vmatpush1.bf16.msra.mxu0 %v1515
    %1557 = vmatprep.subr.bf16.mxu0 0
    %1558 = vmatpush1.bf16.msra.mxu0 %v1516
    %1559 = vmatprep.subr.bf16.mxu0 0
    %1560 = vmatpush1.bf16.msra.mxu0 %v1517
    %1561 = vmatprep.subr.bf16.mxu0 0
    %1562 = vmatpush1.bf16.msra.mxu0 %v1518
    %1563 = vmatprep.subr.bf16.mxu0 0
    %1564 = vmatpush1.bf16.msra.mxu0 %v1519
    %1565 = vmatprep.subr.bf16.mxu0 0
    %1566 = vmatpush1.bf16.msra.mxu0 %v1520
    %1567 = vmatprep.subr.bf16.mxu0 0
    %1568 = vmatpush1.bf16.msra.mxu0 %v1521
    %1569 = vmatprep.subr.bf16.mxu0 0
    %1570 = vmatpush1.bf16.msra.mxu0 %v1522
    %1571 = vmatprep.mubr.bf16.mxu0 %v1403
    %1572 = vmatmul.mubr.bf16.gmra.mrb[0].mxu0 %v1402
    %v1573 = vpop.f32.mrb[0].mxu0
    %v1574 = vadd.f32 %v1441, %v1573
    %v1575 = vpop.f32.mrb[0].mxu0
    %v1576 = vpop.f32.mrb[0].mxu0
    %v1577 = vpop.f32.mrb[0].mxu0
    %1578 = vdwg.mxu0
    %v1579 = vmax.f32 %v1574, 0.0
    %v1580 = vpack.c.bf16 %v1579, %v1579
    %v1581 = vld [vmem:[#allocation10] sm:$0xf]
    %v1582 = vld [vmem:[#allocation10 + $0x4] sm:$0xf]
    %v1583 = vld [vmem:[#allocation10 + $0x8] sm:$0xf]
    %v1584 = vld [vmem:[#allocation10 + $0xc] sm:$0xf]
    %v1585 = vld [vmem:[#allocation10 + $0x10] sm:$0xf]
    %v1586 = vld [vmem:[#allocation10 + $0x14] sm:$0xf]
    %v1587 = vld [vmem:[#allocation10 + $0x18] sm:$0xf]
    %v1588 = vld [vmem:[#allocation10 + $0x1c] sm:$0xf]
    %v1589 = vld [vmem:[#allocation10 + $0x20] sm:$0xf]
    %v1590 = vld [vmem:[#allocation10 + $0x24] sm:$0xf]
    %v1591 = vld [vmem:[#allocation10 + $0x28] sm:$0xf]
    %v1592 = vld [vmem:[#allocation10 + $0x2c] sm:$0xf]
    %v1593 = vld [vmem:[#allocation10 + $0x30] sm:$0xf]
    %v1594 = vld [vmem:[#allocation10 + $0x34] sm:$0xf]
    %v1595 = vld [vmem:[#allocation10 + $0x38] sm:$0xf]
    %v1596 = vld [vmem:[#allocation10 + $0x3c] sm:$0xf]
    %v1597 = vld [vmem:[%s8] sm:$0x1]
    %v1599 = vlaneseq
    %v1600 = vshrl.u32 %v1599, 7
    %v1601 = vsub.s32 0, %v1600
    %v1602 = vrot.slane %v1597, %v1601
    %v1620 = vunpack.c.l.b16 %v1581
    %v1621 = vunpack.c.l.b16 %v1582
    %v1622 = vunpack.c.l.b16 %v1583
    %v1623 = vunpack.c.l.b16 %v1584
    %v1624 = vunpack.c.l.b16 %v1585
    %v1625 = vunpack.c.l.b16 %v1586
    %v1626 = vunpack.c.l.b16 %v1587
    %v1627 = vunpack.c.l.b16 %v1588
    %v1628 = vunpack.c.l.b16 %v1589
    %v1629 = vunpack.c.l.b16 %v1590
    %v1630 = vunpack.c.l.b16 %v1591
    %v1631 = vunpack.c.l.b16 %v1592
    %v1632 = vunpack.c.l.b16 %v1593
    %v1633 = vunpack.c.l.b16 %v1594
    %v1634 = vunpack.c.l.b16 %v1595
    %v1635 = vunpack.c.l.b16 %v1596
    %v1636 = vpack.c.b16 %v1621, %v1620
    %v1637 = vpack.c.b16 %v1623, %v1622
    %v1638 = vpack.c.b16 %v1625, %v1624
    %v1639 = vpack.c.b16 %v1627, %v1626
    %v1640 = vpack.c.b16 %v1629, %v1628
    %v1641 = vpack.c.b16 %v1631, %v1630
    %v1642 = vpack.c.b16 %v1633, %v1632
    %v1643 = vpack.c.b16 %v1635, %v1634
    %1652 = vmatprep.subr.bf16.mxu0 0
    %1653 = vmatpush1.bf16.msra.mxu0 %v1636
    %1654 = vmatprep.subr.bf16.mxu0 0
    %1655 = vmatpush1.bf16.msra.mxu0 %v1637
    %1656 = vmatprep.subr.bf16.mxu0 0
    %1657 = vmatpush1.bf16.msra.mxu0 %v1638
    %1658 = vmatprep.subr.bf16.mxu0 0
    %1659 = vmatpush1.bf16.msra.mxu0 %v1639
    %1660 = vmatprep.subr.bf16.mxu0 0
    %1661 = vmatpush1.bf16.msra.mxu0 %v1640
    %1662 = vmatprep.subr.bf16.mxu0 0
    %1663 = vmatpush1.bf16.msra.mxu0 %v1641
    %1664 = vmatprep.subr.bf16.mxu0 0
    %1665 = vmatpush1.bf16.msra.mxu0 %v1642
    %1666 = vmatprep.subr.bf16.mxu0 0
    %1667 = vmatpush1.bf16.msra.mxu0 %v1643
    %1668 = vmatprep.subr.bf16.mxu0 0
    %1669 = vmatpush1.bf16.msra.mxu0 0
    %1670 = vmatprep.subr.bf16.mxu0 0
    %1671 = vmatpush1.bf16.msra.mxu0 0
    %1672 = vmatprep.subr.bf16.mxu0 0
    %1673 = vmatpush1.bf16.msra.mxu0 0
    %1674 = vmatprep.subr.bf16.mxu0 0
    %1675 = vmatpush1.bf16.msra.mxu0 0
    %1676 = vmatprep.subr.bf16.mxu0 0
    %1677 = vmatpush1.bf16.msra.mxu0 0
    %1678 = vmatprep.subr.bf16.mxu0 0
    %1679 = vmatpush1.bf16.msra.mxu0 0
    %1680 = vmatprep.subr.bf16.mxu0 0
    %1681 = vmatpush1.bf16.msra.mxu0 0
    %1682 = vmatprep.subr.bf16.mxu0 0
    %1683 = vmatpush1.bf16.msra.mxu0 0
    %1684 = vmatprep.mubr.bf16.mxu0 0
    %1685 = vmatmul.mubr.bf16.gmra.mrb[0].mxu0 %v1580
    %v1686 = vpop.f32.mrb[0].mxu0
    %v1687 = vadd.f32 %v1602, %v1686
    %v1688 = vpop.f32.mrb[0].mxu0
    %v1689 = vpop.f32.mrb[0].mxu0
    %v1690 = vpop.f32.mrb[0].mxu0
    %1691 = vdwg.mxu0
    %v1692 = vmax.f32 %v1687, 0.0
    %v1693 = vpack.c.bf16 %v1692, %v1692
    %v1694 = vld [vmem:[#allocation11] sm:$0xff]
    %v1695 = vld [vmem:[#allocation11 + $0x8] sm:$0xff]
    %v1696 = vld [vmem:[#allocation11 + $0x10] sm:$0xff]
    %v1697 = vld [vmem:[#allocation11 + $0x18] sm:$0xff]
    %v1698 = vld [vmem:[#allocation11 + $0x20] sm:$0xff]
    %v1699 = vld [vmem:[#allocation11 + $0x28] sm:$0xff]
    %v1700 = vld [vmem:[#allocation11 + $0x30] sm:$0xff]
    %v1701 = vld [vmem:[#allocation11 + $0x38] sm:$0xff]
    %v1702 = vld [vmem:[#allocation11 + $0x40] sm:$0xff]
    %v1703 = vld [vmem:[#allocation11 + $0x48] sm:$0xff]
    %v1704 = vld [vmem:[#allocation11 + $0x50] sm:$0xff]
    %v1705 = vld [vmem:[#allocation11 + $0x58] sm:$0xff]
    %v1706 = vld [vmem:[#allocation11 + $0x60] sm:$0xff]
    %v1707 = vld [vmem:[#allocation11 + $0x68] sm:$0xff]
    %v1708 = vld [vmem:[#allocation11 + $0x70] sm:$0xff]
    %v1709 = vld [vmem:[#allocation11 + $0x78] sm:$0xff]
    %v1710 = vld [vmem:[%s10] sm:$0x3]
    %v1712 = vlaneseq
    %v1713 = vshrl.u32 %v1712, 7
    %v1714 = vsub.s32 0, %v1713
    %v1715 = vrot.slane %v1710, %v1714
    %v1716 = vlaneseq
    %v1717 = vshrl.u32 %v1716, 7
    %v1718 = vsub.s32 1, %v1717
    %v1719 = vrot.slane %v1710, %v1718
    %v1738 = vunpack.c.l.b16 %v1694
    %v1739 = vunpack.c.h.b16 %v1694
    %v1740 = vunpack.c.l.b16 %v1695
    %v1741 = vunpack.c.h.b16 %v1695
    %v1742 = vunpack.c.l.b16 %v1696
    %v1743 = vunpack.c.h.b16 %v1696
    %v1744 = vunpack.c.l.b16 %v1697
    %v1745 = vunpack.c.h.b16 %v1697
    %v1746 = vunpack.c.l.b16 %v1698
    %v1747 = vunpack.c.h.b16 %v1698
    %v1748 = vunpack.c.l.b16 %v1699
    %v1749 = vunpack.c.h.b16 %v1699
    %v1750 = vunpack.c.l.b16 %v1700
    %v1751 = vunpack.c.h.b16 %v1700
    %v1752 = vunpack.c.l.b16 %v1701
    %v1753 = vunpack.c.h.b16 %v1701
    %v1754 = vunpack.c.l.b16 %v1702
    %v1755 = vunpack.c.h.b16 %v1702
    %v1756 = vunpack.c.l.b16 %v1703
    %v1757 = vunpack.c.h.b16 %v1703
    %v1758 = vunpack.c.l.b16 %v1704
    %v1759 = vunpack.c.h.b16 %v1704
    %v1760 = vunpack.c.l.b16 %v1705
    %v1761 = vunpack.c.h.b16 %v1705
    %v1762 = vunpack.c.l.b16 %v1706
    %v1763 = vunpack.c.h.b16 %v1706
    %v1764 = vunpack.c.l.b16 %v1707
    %v1765 = vunpack.c.h.b16 %v1707
    %v1766 = vunpack.c.l.b16 %v1708
    %v1767 = vunpack.c.h.b16 %v1708
    %v1768 = vunpack.c.l.b16 %v1709
    %v1769 = vunpack.c.h.b16 %v1709
    %v1770 = vpack.c.b16 %v1740, %v1738
    %v1771 = vpack.c.b16 %v1741, %v1739
    %v1772 = vpack.c.b16 %v1744, %v1742
    %v1773 = vpack.c.b16 %v1745, %v1743
    %v1774 = vpack.c.b16 %v1748, %v1746
    %v1775 = vpack.c.b16 %v1749, %v1747
    %v1776 = vpack.c.b16 %v1752, %v1750
    %v1777 = vpack.c.b16 %v1753, %v1751
    %v1778 = vpack.c.b16 %v1756, %v1754
    %v1779 = vpack.c.b16 %v1757, %v1755
    %v1780 = vpack.c.b16 %v1760, %v1758
    %v1781 = vpack.c.b16 %v1761, %v1759
    %v1782 = vpack.c.b16 %v1764, %v1762
    %v1783 = vpack.c.b16 %v1765, %v1763
    %v1784 = vpack.c.b16 %v1768, %v1766
    %v1785 = vpack.c.b16 %v1769, %v1767
    %1802 = vmatprep.subr.bf16.mxu0 %v1771
    %1803 = vmatpush1.bf16.msra.mxu0 %v1770
    %1804 = vmatprep.subr.bf16.mxu0 %v1773
    %1805 = vmatpush1.bf16.msra.mxu0 %v1772
    %1806 = vmatprep.subr.bf16.mxu0 %v1775
    %1807 = vmatpush1.bf16.msra.mxu0 %v1774
    %1808 = vmatprep.subr.bf16.mxu0 %v1777
    %1809 = vmatpush1.bf16.msra.mxu0 %v1776
    %1810 = vmatprep.subr.bf16.mxu0 %v1779
    %1811 = vmatpush1.bf16.msra.mxu0 %v1778
    %1812 = vmatprep.subr.bf16.mxu0 %v1781
    %1813 = vmatpush1.bf16.msra.mxu0 %v1780
    %1814 = vmatprep.subr.bf16.mxu0 %v1783
    %1815 = vmatpush1.bf16.msra.mxu0 %v1782
    %1816 = vmatprep.subr.bf16.mxu0 %v1785
    %1817 = vmatpush1.bf16.msra.mxu0 %v1784
    %1818 = vmatprep.subr.bf16.mxu0 0
    %1819 = vmatpush1.bf16.msra.mxu0 0
    %1820 = vmatprep.subr.bf16.mxu0 0
    %1821 = vmatpush1.bf16.msra.mxu0 0
    %1822 = vmatprep.subr.bf16.mxu0 0
    %1823 = vmatpush1.bf16.msra.mxu0 0
    %1824 = vmatprep.subr.bf16.mxu0 0
    %1825 = vmatpush1.bf16.msra.mxu0 0
    %1826 = vmatprep.subr.bf16.mxu0 0
    %1827 = vmatpush1.bf16.msra.mxu0 0
    %1828 = vmatprep.subr.bf16.mxu0 0
    %1829 = vmatpush1.bf16.msra.mxu0 0
    %1830 = vmatprep.subr.bf16.mxu0 0
    %1831 = vmatpush1.bf16.msra.mxu0 0
    %1832 = vmatprep.subr.bf16.mxu0 0
    %1833 = vmatpush1.bf16.msra.mxu0 0
    %1834 = vmatprep.mubr.bf16.mxu0 0
    %1835 = vmatmul.mubr.bf16.gmra.mrb[0].mxu0 %v1693
    %v1836 = vpop.f32.mrb[0].mxu0
    %v1837 = vadd.f32 %v1715, %v1836
    %v1838 = vpop.f32.mrb[0].mxu0
    %v1839 = vadd.f32 %v1719, %v1838
    %v1840 = vpop.f32.mrb[0].mxu0
    %v1841 = vpop.f32.mrb[0].mxu0
    %1842 = vdwg.mxu0
    %v1843 = vmax.f32 %v1837, 0.0
    %v1844 = vmax.f32 %v1839, 0.0
    %v1845 = vpack.c.bf16 %v1843, %v1843
    %v1846 = vpack.c.bf16 %v1844, %v1844
    %v1847 = vld [vmem:[#allocation13] sm:$0xff]
    %v1848 = vld [vmem:[#allocation13 + $0x8] sm:$0xf]
    %v1849 = vld [vmem:[#allocation13 + $0xc] sm:$0xff]
    %v1850 = vld [vmem:[#allocation13 + $0x14] sm:$0xf]
    %v1851 = vld [vmem:[#allocation13 + $0x18] sm:$0xff]
    %v1852 = vld [vmem:[#allocation13 + $0x20] sm:$0xf]
    %v1853 = vld [vmem:[#allocation13 + $0x24] sm:$0xff]
    %v1854 = vld [vmem:[#allocation13 + $0x2c] sm:$0xf]
    %v1855 = vld [vmem:[#allocation13 + $0x30] sm:$0xff]
    %v1856 = vld [vmem:[#allocation13 + $0x38] sm:$0xf]
    %v1857 = vld [vmem:[#allocation13 + $0x3c] sm:$0xff]
    %v1858 = vld [vmem:[#allocation13 + $0x44] sm:$0xf]
    %v1859 = vld [vmem:[#allocation13 + $0x48] sm:$0xff]
    %v1860 = vld [vmem:[#allocation13 + $0x50] sm:$0xf]
    %v1861 = vld [vmem:[#allocation13 + $0x54] sm:$0xff]
    %v1862 = vld [vmem:[#allocation13 + $0x5c] sm:$0xf]
    %v1863 = vld [vmem:[#allocation13 + $0x60] sm:$0xff]
    %v1864 = vld [vmem:[#allocation13 + $0x68] sm:$0xf]
    %v1865 = vld [vmem:[#allocation13 + $0x6c] sm:$0xff]
    %v1866 = vld [vmem:[#allocation13 + $0x74] sm:$0xf]
    %v1867 = vld [vmem:[#allocation13 + $0x78] sm:$0xff]
    %v1868 = vld [vmem:[#allocation13 + $0x80] sm:$0xf]
    %v1869 = vld [vmem:[#allocation13 + $0x84] sm:$0xff]
    %v1870 = vld [vmem:[#allocation13 + $0x8c] sm:$0xf]
    %v1871 = vld [vmem:[#allocation13 + $0x90] sm:$0xff]
    %v1872 = vld [vmem:[#allocation13 + $0x98] sm:$0xf]
    %v1873 = vld [vmem:[#allocation13 + $0x9c] sm:$0xff]
    %v1874 = vld [vmem:[#allocation13 + $0xa4] sm:$0xf]
    %v1875 = vld [vmem:[#allocation13 + $0xa8] sm:$0xff]
    %v1876 = vld [vmem:[#allocation13 + $0xb0] sm:$0xf]
    %v1877 = vld [vmem:[#allocation13 + $0xb4] sm:$0xff]
    %v1878 = vld [vmem:[#allocation13 + $0xbc] sm:$0xf]
    %v1879 = vld [vmem:[#allocation13 + $0xc0] sm:$0xff]
    %v1880 = vld [vmem:[#allocation13 + $0xc8] sm:$0xf]
    %v1881 = vld [vmem:[#allocation13 + $0xcc] sm:$0xff]
    %v1882 = vld [vmem:[#allocation13 + $0xd4] sm:$0xf]
    %v1883 = vld [vmem:[#allocation13 + $0xd8] sm:$0xff]
    %v1884 = vld [vmem:[#allocation13 + $0xe0] sm:$0xf]
    %v1885 = vld [vmem:[#allocation13 + $0xe4] sm:$0xff]
    %v1886 = vld [vmem:[#allocation13 + $0xec] sm:$0xf]
    %v1887 = vld [vmem:[#allocation13 + $0xf0] sm:$0xff]
    %v1888 = vld [vmem:[#allocation13 + $0xf8] sm:$0xf]
    %v1889 = vld [vmem:[#allocation13 + $0xfc] sm:$0xff]
    %v1890 = vld [vmem:[#allocation13 + $0x104] sm:$0xf]
    %v1891 = vld [vmem:[#allocation13 + $0x108] sm:$0xff]
    %v1892 = vld [vmem:[#allocation13 + $0x110] sm:$0xf]
    %v1893 = vld [vmem:[#allocation13 + $0x114] sm:$0xff]
    %v1894 = vld [vmem:[#allocation13 + $0x11c] sm:$0xf]
    %v1895 = vld [vmem:[#allocation13 + $0x120] sm:$0xff]
    %v1896 = vld [vmem:[#allocation13 + $0x128] sm:$0xf]
    %v1897 = vld [vmem:[#allocation13 + $0x12c] sm:$0xff]
    %v1898 = vld [vmem:[#allocation13 + $0x134] sm:$0xf]
    %v1899 = vld [vmem:[#allocation13 + $0x138] sm:$0xff]
    %v1900 = vld [vmem:[#allocation13 + $0x140] sm:$0xf]
    %v1901 = vld [vmem:[#allocation13 + $0x144] sm:$0xff]
    %v1902 = vld [vmem:[#allocation13 + $0x14c] sm:$0xf]
    %v1903 = vld [vmem:[#allocation13 + $0x150] sm:$0xff]
    %v1904 = vld [vmem:[#allocation13 + $0x158] sm:$0xf]
    %v1905 = vld [vmem:[#allocation13 + $0x15c] sm:$0xff]
    %v1906 = vld [vmem:[#allocation13 + $0x164] sm:$0xf]
    %v1907 = vld [vmem:[#allocation13 + $0x168] sm:$0xff]
    %v1908 = vld [vmem:[#allocation13 + $0x170] sm:$0xf]
    %v1909 = vld [vmem:[#allocation13 + $0x174] sm:$0xff]
    %v1910 = vld [vmem:[#allocation13 + $0x17c] sm:$0xf]
    %v1911 = vld [vmem:[%s12] sm:$0x7]
    %v1913 = vlaneseq
    %v1914 = vshrl.u32 %v1913, 7
    %v1915 = vsub.s32 0, %v1914
    %v1916 = vrot.slane %v1911, %v1915
    %v1917 = vlaneseq
    %v1918 = vshrl.u32 %v1917, 7
    %v1919 = vsub.s32 1, %v1918
    %v1920 = vrot.slane %v1911, %v1919
    %v1921 = vlaneseq
    %v1922 = vshrl.u32 %v1921, 7
    %v1923 = vsub.s32 2, %v1922
    %v1924 = vrot.slane %v1911, %v1923
    %v1992 = vunpack.c.l.b16 %v1847
    %v1993 = vunpack.c.h.b16 %v1847
    %v1994 = vunpack.c.l.b16 %v1848
    %v1995 = vunpack.c.l.b16 %v1849
    %v1996 = vunpack.c.h.b16 %v1849
    %v1997 = vunpack.c.l.b16 %v1850
    %v1998 = vunpack.c.l.b16 %v1851
    %v1999 = vunpack.c.h.b16 %v1851
    %v2000 = vunpack.c.l.b16 %v1852
    %v2001 = vunpack.c.l.b16 %v1853
    %v2002 = vunpack.c.h.b16 %v1853
    %v2003 = vunpack.c.l.b16 %v1854
    %v2004 = vunpack.c.l.b16 %v1855
    %v2005 = vunpack.c.h.b16 %v1855
    %v2006 = vunpack.c.l.b16 %v1856
    %v2007 = vunpack.c.l.b16 %v1857
    %v2008 = vunpack.c.h.b16 %v1857
    %v2009 = vunpack.c.l.b16 %v1858
    %v2010 = vunpack.c.l.b16 %v1859
    %v2011 = vunpack.c.h.b16 %v1859
    %v2012 = vunpack.c.l.b16 %v1860
    %v2013 = vunpack.c.l.b16 %v1861
    %v2014 = vunpack.c.h.b16 %v1861
    %v2015 = vunpack.c.l.b16 %v1862
    %v2016 = vunpack.c.l.b16 %v1863
    %v2017 = vunpack.c.h.b16 %v1863
    %v2018 = vunpack.c.l.b16 %v1864
    %v2019 = vunpack.c.l.b16 %v1865
    %v2020 = vunpack.c.h.b16 %v1865
    %v2021 = vunpack.c.l.b16 %v1866
    %v2022 = vunpack.c.l.b16 %v1867
    %v2023 = vunpack.c.h.b16 %v1867
    %v2024 = vunpack.c.l.b16 %v1868
    %v2025 = vunpack.c.l.b16 %v1869
    %v2026 = vunpack.c.h.b16 %v1869
    %v2027 = vunpack.c.l.b16 %v1870
    %v2028 = vunpack.c.l.b16 %v1871
    %v2029 = vunpack.c.h.b16 %v1871
    %v2030 = vunpack.c.l.b16 %v1872
    %v2031 = vunpack.c.l.b16 %v1873
    %v2032 = vunpack.c.h.b16 %v1873
    %v2033 = vunpack.c.l.b16 %v1874
    %v2034 = vunpack.c.l.b16 %v1875
    %v2035 = vunpack.c.h.b16 %v1875
    %v2036 = vunpack.c.l.b16 %v1876
    %v2037 = vunpack.c.l.b16 %v1877
    %v2038 = vunpack.c.h.b16 %v1877
    %v2039 = vunpack.c.l.b16 %v1878
    %v2040 = vunpack.c.l.b16 %v1879
    %v2041 = vunpack.c.h.b16 %v1879
    %v2042 = vunpack.c.l.b16 %v1880
    %v2043 = vunpack.c.l.b16 %v1881
    %v2044 = vunpack.c.h.b16 %v1881
    %v2045 = vunpack.c.l.b16 %v1882
    %v2046 = vunpack.c.l.b16 %v1883
    %v2047 = vunpack.c.h.b16 %v1883
    %v2048 = vunpack.c.l.b16 %v1884
    %v2049 = vunpack.c.l.b16 %v1885
    %v2050 = vunpack.c.h.b16 %v1885
    %v2051 = vunpack.c.l.b16 %v1886
    %v2052 = vunpack.c.l.b16 %v1887
    %v2053 = vunpack.c.h.b16 %v1887
    %v2054 = vunpack.c.l.b16 %v1888
    %v2055 = vunpack.c.l.b16 %v1889
    %v2056 = vunpack.c.h.b16 %v1889
    %v2057 = vunpack.c.l.b16 %v1890
    %v2058 = vunpack.c.l.b16 %v1891
    %v2059 = vunpack.c.h.b16 %v1891
    %v2060 = vunpack.c.l.b16 %v1892
    %v2061 = vunpack.c.l.b16 %v1893
    %v2062 = vunpack.c.h.b16 %v1893
    %v2063 = vunpack.c.l.b16 %v1894
    %v2064 = vunpack.c.l.b16 %v1895
    %v2065 = vunpack.c.h.b16 %v1895
    %v2066 = vunpack.c.l.b16 %v1896
    %v2067 = vunpack.c.l.b16 %v1897
    %v2068 = vunpack.c.h.b16 %v1897
    %v2069 = vunpack.c.l.b16 %v1898
    %v2070 = vunpack.c.l.b16 %v1899
    %v2071 = vunpack.c.h.b16 %v1899
    %v2072 = vunpack.c.l.b16 %v1900
    %v2073 = vunpack.c.l.b16 %v1901
    %v2074 = vunpack.c.h.b16 %v1901
    %v2075 = vunpack.c.l.b16 %v1902
    %v2076 = vunpack.c.l.b16 %v1903
    %v2077 = vunpack.c.h.b16 %v1903
    %v2078 = vunpack.c.l.b16 %v1904
    %v2079 = vunpack.c.l.b16 %v1905
    %v2080 = vunpack.c.h.b16 %v1905
    %v2081 = vunpack.c.l.b16 %v1906
    %v2082 = vunpack.c.l.b16 %v1907
    %v2083 = vunpack.c.h.b16 %v1907
    %v2084 = vunpack.c.l.b16 %v1908
    %v2085 = vunpack.c.l.b16 %v1909
    %v2086 = vunpack.c.h.b16 %v1909
    %v2087 = vunpack.c.l.b16 %v1910
    %v2088 = vpack.c.b16 %v1995, %v1992
    %v2089 = vpack.c.b16 %v1996, %v1993
    %v2090 = vpack.c.b16 %v1997, %v1994
    %v2091 = vpack.c.b16 %v2001, %v1998
    %v2092 = vpack.c.b16 %v2002, %v1999
    %v2093 = vpack.c.b16 %v2003, %v2000
    %v2094 = vpack.c.b16 %v2007, %v2004
    %v2095 = vpack.c.b16 %v2008, %v2005
    %v2096 = vpack.c.b16 %v2009, %v2006
    %v2097 = vpack.c.b16 %v2013, %v2010
    %v2098 = vpack.c.b16 %v2014, %v2011
    %v2099 = vpack.c.b16 %v2015, %v2012
    %v2100 = vpack.c.b16 %v2019, %v2016
    %v2101 = vpack.c.b16 %v2020, %v2017
    %v2102 = vpack.c.b16 %v2021, %v2018
    %v2103 = vpack.c.b16 %v2025, %v2022
    %v2104 = vpack.c.b16 %v2026, %v2023
    %v2105 = vpack.c.b16 %v2027, %v2024
    %v2106 = vpack.c.b16 %v2031, %v2028
    %v2107 = vpack.c.b16 %v2032, %v2029
    %v2108 = vpack.c.b16 %v2033, %v2030
    %v2109 = vpack.c.b16 %v2037, %v2034
    %v2110 = vpack.c.b16 %v2038, %v2035
    %v2111 = vpack.c.b16 %v2039, %v2036
    %v2112 = vpack.c.b16 %v2043, %v2040
    %v2113 = vpack.c.b16 %v2044, %v2041
    %v2114 = vpack.c.b16 %v2045, %v2042
    %v2115 = vpack.c.b16 %v2049, %v2046
    %v2116 = vpack.c.b16 %v2050, %v2047
    %v2117 = vpack.c.b16 %v2051, %v2048
    %v2118 = vpack.c.b16 %v2055, %v2052
    %v2119 = vpack.c.b16 %v2056, %v2053
    %v2120 = vpack.c.b16 %v2057, %v2054
    %v2121 = vpack.c.b16 %v2061, %v2058
    %v2122 = vpack.c.b16 %v2062, %v2059
    %v2123 = vpack.c.b16 %v2063, %v2060
    %v2124 = vpack.c.b16 %v2067, %v2064
    %v2125 = vpack.c.b16 %v2068, %v2065
    %v2126 = vpack.c.b16 %v2069, %v2066
    %v2127 = vpack.c.b16 %v2073, %v2070
    %v2128 = vpack.c.b16 %v2074, %v2071
    %v2129 = vpack.c.b16 %v2075, %v2072
    %v2130 = vpack.c.b16 %v2079, %v2076
    %v2131 = vpack.c.b16 %v2080, %v2077
    %v2132 = vpack.c.b16 %v2081, %v2078
    %v2133 = vpack.c.b16 %v2085, %v2082
    %v2134 = vpack.c.b16 %v2086, %v2083
    %v2135 = vpack.c.b16 %v2087, %v2084
    %2184 = vmatprep.subr.bf16.mxu0 %v2089
    %2185 = vmatpush1.bf16.msra.mxu0 %v2088
    %2186 = vmatprep.subr.bf16.mxu0 %v2092
    %2187 = vmatpush1.bf16.msra.mxu0 %v2091
    %2188 = vmatprep.subr.bf16.mxu0 %v2095
    %2189 = vmatpush1.bf16.msra.mxu0 %v2094
    %2190 = vmatprep.subr.bf16.mxu0 %v2098
    %2191 = vmatpush1.bf16.msra.mxu0 %v2097
    %2192 = vmatprep.subr.bf16.mxu0 %v2101
    %2193 = vmatpush1.bf16.msra.mxu0 %v2100
    %2194 = vmatprep.subr.bf16.mxu0 %v2104
    %2195 = vmatpush1.bf16.msra.mxu0 %v2103
    %2196 = vmatprep.subr.bf16.mxu0 %v2107
    %2197 = vmatpush1.bf16.msra.mxu0 %v2106
    %2198 = vmatprep.subr.bf16.mxu0 %v2110
    %2199 = vmatpush1.bf16.msra.mxu0 %v2109
    %2200 = vmatprep.subr.bf16.mxu0 %v2113
    %2201 = vmatpush1.bf16.msra.mxu0 %v2112
    %2202 = vmatprep.subr.bf16.mxu0 %v2116
    %2203 = vmatpush1.bf16.msra.mxu0 %v2115
    %2204 = vmatprep.subr.bf16.mxu0 %v2119
    %2205 = vmatpush1.bf16.msra.mxu0 %v2118
    %2206 = vmatprep.subr.bf16.mxu0 %v2122
    %2207 = vmatpush1.bf16.msra.mxu0 %v2121
    %2208 = vmatprep.subr.bf16.mxu0 %v2125
    %2209 = vmatpush1.bf16.msra.mxu0 %v2124
    %2210 = vmatprep.subr.bf16.mxu0 %v2128
    %2211 = vmatpush1.bf16.msra.mxu0 %v2127
    %2212 = vmatprep.subr.bf16.mxu0 %v2131
    %2213 = vmatpush1.bf16.msra.mxu0 %v2130
    %2214 = vmatprep.subr.bf16.mxu0 %v2134
    %2215 = vmatpush1.bf16.msra.mxu0 %v2133
    %2216 = vmatprep.mubr.bf16.mxu0 %v1846
    %2217 = vmatmul.mubr.bf16.gmra.mrb[0].mxu0 %v1845
    %v2218 = vpop.f32.mrb[0].mxu0
    %v2219 = vadd.f32 %v1916, %v2218
    %v2220 = vpop.f32.mrb[0].mxu0
    %v2221 = vadd.f32 %v1920, %v2220
    %v2222 = vpop.f32.mrb[0].mxu0
    %v2223 = vpop.f32.mrb[0].mxu0
    %2224 = vdwg.mxu0
    %2225 = vmatprep.subr.bf16.mxu0 0
    %2226 = vmatpush1.bf16.msra.mxu0 %v2090
    %2227 = vmatprep.subr.bf16.mxu0 0
    %2228 = vmatpush1.bf16.msra.mxu0 %v2093
    %2229 = vmatprep.subr.bf16.mxu0 0
    %2230 = vmatpush1.bf16.msra.mxu0 %v2096
    %2231 = vmatprep.subr.bf16.mxu0 0
    %2232 = vmatpush1.bf16.msra.mxu0 %v2099
    %2233 = vmatprep.subr.bf16.mxu0 0
    %2234 = vmatpush1.bf16.msra.mxu0 %v2102
    %2235 = vmatprep.subr.bf16.mxu0 0
    %2236 = vmatpush1.bf16.msra.mxu0 %v2105
    %2237 = vmatprep.subr.bf16.mxu0 0
    %2238 = vmatpush1.bf16.msra.mxu0 %v2108
    %2239 = vmatprep.subr.bf16.mxu0 0
    %2240 = vmatpush1.bf16.msra.mxu0 %v2111
    %2241 = vmatprep.subr.bf16.mxu0 0
    %2242 = vmatpush1.bf16.msra.mxu0 %v2114
    %2243 = vmatprep.subr.bf16.mxu0 0
    %2244 = vmatpush1.bf16.msra.mxu0 %v2117
    %2245 = vmatprep.subr.bf16.mxu0 0
    %2246 = vmatpush1.bf16.msra.mxu0 %v2120
    %2247 = vmatprep.subr.bf16.mxu0 0
    %2248 = vmatpush1.bf16.msra.mxu0 %v2123
    %2249 = vmatprep.subr.bf16.mxu0 0
    %2250 = vmatpush1.bf16.msra.mxu0 %v2126
    %2251 = vmatprep.subr.bf16.mxu0 0
    %2252 = vmatpush1.bf16.msra.mxu0 %v2129
    %2253 = vmatprep.subr.bf16.mxu0 0
    %2254 = vmatpush1.bf16.msra.mxu0 %v2132
    %2255 = vmatprep.subr.bf16.mxu0 0
    %2256 = vmatpush1.bf16.msra.mxu0 %v2135
    %2257 = vmatprep.mubr.bf16.mxu0 %v1846
    %2258 = vmatmul.mubr.bf16.gmra.mrb[0].mxu0 %v1845
    %v2259 = vpop.f32.mrb[0].mxu0
    %v2260 = vadd.f32 %v1924, %v2259
    %v2261 = vpop.f32.mrb[0].mxu0
    %v2262 = vpop.f32.mrb[0].mxu0
    %v2263 = vpop.f32.mrb[0].mxu0
    %2264 = vdwg.mxu0
    %2265 = vst [vmem:[#allocation14] sm:$0xff] %v2219
    %2266 = vst [vmem:[#allocation14 + $0x8] sm:$0xff] %v2221
    %2267 = vst [vmem:[#allocation14 + $0x10] sm:$0xff] %v2260
    // Predicated region
    $region82: #{tpu_custom_call.1} parent=1 // pred_check
      _
    $region83: #{tpu_custom_call.1} parent=1 // pred_check_branch
      %2269 = sbr.rel (0) target = $region85
    $region84: #{tpu_custom_call.1} parent=1 // pred_region
      %s2271 = ssub.s32 384, 384
      %2272 = vsyncadd [#allocation4], %s2271
      %s2274 = sshll.u32 [#allocation14], 4
      %s2275 = int_to_ptr.vmem [resolvable:$true] %s2274
      %2277 = dma.vmem_to_hbm [thread:$0]  %s2275, 384, %s13, [#allocation4]
    $region85: #{tpu_custom_call.1} parent=1 // pred_fallthru
      _
    // Predicated region
    $region86: #{tpu_custom_call.1} parent=1 // pred_check
      _
    $region87: #{tpu_custom_call.1} parent=1 // pred_check_branch
      %2279 = sbr.rel (0) target = $region89
    $region88: #{tpu_custom_call.1} parent=1 // pred_region
      %2280 = dma.done [#allocation4], 384
    $region89: #{tpu_custom_call.1} parent=1 // pred_fallthru
      _
    %2281 = vsyncpa [#allocation3], 1
    %2282 = vsyncpa [#allocation6], 1
    %2283 = vsyncpa [#allocation9], 1
    %2284 = vsyncpa [#allocation12], 1
    %2285 = vsyncpa [#allocation4], 1

</llo_original>
